<compile_context>
chip_gen: v5e
topology: v5e:2x2
jax: 0.10.0
libtpu: 0.0.40
codegen_flags: <defaults>
</compile_context>

<pallas_src>
import numpy as np
import jax
import jax.numpy as jnp
from jax import lax
from jax.experimental import pallas as pl
from jax.experimental.pallas import tpu as pltpu


def _round_up(x, m):
    return (x + m - 1) // m * m


def _pick_time_chunk(seq_len, max_chunk=32):
    """Largest divisor of seq_len that is <= max_chunk (no time padding allowed:
    extra zero-input steps would still update h/c)."""
    for c in range(min(seq_len, max_chunk), 0, -1):
        if seq_len % c == 0:
            return c
    return seq_len


def _pick_batch_block(b_pad):
    """Split the padded batch across 2 TensorCores when both halves stay
    sublane-aligned; otherwise keep a single block."""
    if b_pad % 16 == 0:
        return b_pad // 2
    return b_pad


# ----------------------------- Pallas kernel ---------------------------------
def lstm_last_proj_kernel(gx_ref, w_hh_ref, w_proj_ref, b_proj_ref, out_ref,
                          h_sc, c_sc):
    """LSTM recurrence over a chunk of precomputed input gates.

    gx_ref:     (T_chunk, B_blk, 4*H_pad) bf16  x@W_ih^T + (b_ih+b_hh), time-major
    w_hh_ref:   (H_pad, 4*H_pad)          bf16  hidden->gates (transposed, per-gate padded)
    w_proj_ref: (H_pad, C_pad)            bf16  final projection W (padded)
    b_proj_ref: (1, C_pad)                f32   final projection b (padded)
    out_ref:    (B_blk, C_pad)            f32
    h_sc, c_sc: (B_blk, H_pad)            f32   carried hidden / cell state
    """
    t_blk = pl.program_id(1)
    n_t = pl.num_programs(1)
    t_chunk = gx_ref.shape[0]
    h_pad = w_hh_ref.shape[0]

    @pl.when(t_blk == 0)
    def _():
        h_sc[...] = jnp.zeros_like(h_sc)
        c_sc[...] = jnp.zeros_like(c_sc)

    w_hh = w_hh_ref[...]  # bf16, held across the chunk

    def step(t, carry):
        h, c = carry
        # Serial critical path: one bf16 MXU matmul + f32 accumulate per step.
        gates = gx_ref[t].astype(jnp.float32) + jnp.dot(
            h.astype(jnp.bfloat16), w_hh, preferred_element_type=jnp.float32)
        # Gate order [i, f, o, g]: one sigmoid over the contiguous 3*H_pad slab.
        # sigmoid(x) = 0.5*tanh(0.5*x) + 0.5  (single EUP tanh per element).
        sig = 0.5 * jnp.tanh(0.5 * gates[:, :3 * h_pad]) + 0.5
        i = sig[:, 0 * h_pad:1 * h_pad]
        f = sig[:, 1 * h_pad:2 * h_pad]
        o = sig[:, 2 * h_pad:3 * h_pad]
        g = jnp.tanh(gates[:, 3 * h_pad:4 * h_pad])
        c_new = f * c + i * g
        h_new = o * jnp.tanh(c_new)
        return (h_new, c_new)

    # Short chunks: full unroll for LLO scheduling visibility; long chunks:
    # bounded unroll to avoid vreg spills.
    unroll = True if t_chunk <= 16 else 8
    h_last, c_last = lax.fori_loop(0, t_chunk, step, (h_sc[...], c_sc[...]),
                                   unroll=unroll)
    h_sc[...] = h_last
    c_sc[...] = c_last

    @pl.when(t_blk == n_t - 1)
    def _():
        out_ref[...] = (jnp.dot(h_last.astype(jnp.bfloat16), w_proj_ref[...],
                                preferred_element_type=jnp.float32)
                        + b_proj_ref[...])


# ------------------------------- Wrapper --------------------------------------
def text_lstm_forward(x, params):
    """x: (batch, seq_len, char_size) float32 -> (batch, char_size) float32."""
    batch, seq_len, char_size = x.shape
    n_hidden = params["w_hh"].shape[1]

    H_pad = _round_up(n_hidden, 128)
    C_pad = _round_up(char_size, 128)
    B_pad = _round_up(batch, 8)

    T_chunk = _pick_time_chunk(seq_len)
    B_blk = _pick_batch_block(B_pad)
    n_t = seq_len // T_chunk
    n_b = B_pad // B_blk

    x = x.astype(jnp.float32)

    # Per-gate padded weights. PyTorch layout: W_ih (4H, C), W_hh (4H, H), gates
    # stacked [i, f, g, o]. Reorder to [i, f, o, g] so the three sigmoid gates
    # are contiguous; pad each gate's output-hidden dim to H_pad so gate slices
    # are exact 128-lane tiles. Padded lanes get zero weights/bias, so their
    # h/c stay numerically inert.
    perm = np.array([0, 1, 3, 2])  # i, f, o, g
    w_ih = params["w_ih"].astype(jnp.float32).reshape(4, n_hidden, char_size)[perm]
    w_hh = params["w_hh"].astype(jnp.float32).reshape(4, n_hidden, n_hidden)[perm]
    b_g = (params["b_ih"] + params["b_hh"]).astype(jnp.float32).reshape(4, n_hidden)[perm]

    w_ih_p = jnp.zeros((4, H_pad, char_size), jnp.float32).at[:, :n_hidden, :].set(w_ih)
    w_hh_p = jnp.zeros((4, H_pad, H_pad), jnp.float32).at[:, :n_hidden, :n_hidden].set(w_hh)
    b_g_p = jnp.zeros((4, H_pad), jnp.float32).at[:, :n_hidden].set(b_g)

    # (in_dim, gate, out_hidden) -> (in_dim, 4*H_pad)
    w_ih_t = jnp.transpose(w_ih_p, (2, 0, 1)).reshape(char_size, 4 * H_pad)
    w_hh_t = jnp.transpose(w_hh_p, (2, 0, 1)).reshape(H_pad, 4 * H_pad)
    b_gates = b_g_p.reshape(1, 4 * H_pad)

    # Pad x's (tiny) batch dim first, then emit gx directly in its final padded,
    # time-major shape — gx (the largest tensor) is materialized exactly once.
    x_p = jnp.zeros((B_pad, seq_len, char_size), jnp.float32).at[:batch].set(x)
    gx = jnp.einsum("bsc,cg->sbg", x_p, w_ih_t) + b_gates       # (S, B_pad, 4*H_pad) f32
    gx = gx.astype(jnp.bfloat16)                                 # halve DMA + VMEM bytes

    w_hh_bf = w_hh_t.astype(jnp.bfloat16)
    w_proj = jnp.zeros((H_pad, C_pad), jnp.float32).at[:n_hidden, :char_size].set(
        params["W"].astype(jnp.float32)).astype(jnp.bfloat16)
    b_proj = jnp.zeros((1, C_pad), jnp.float32).at[0, :char_size].set(
        params["b"].astype(jnp.float32))

    grid_spec = pltpu.PrefetchScalarGridSpec(
        num_scalar_prefetch=0,
        grid=(n_b, n_t),                       # batch blocks outer, time inner
        in_specs=[
            pl.BlockSpec((T_chunk, B_blk, 4 * H_pad), lambda b, t: (t, b, 0)),
            pl.BlockSpec((H_pad, 4 * H_pad), lambda b, t: (0, 0)),
            pl.BlockSpec((H_pad, C_pad), lambda b, t: (0, 0)),
            pl.BlockSpec((1, C_pad), lambda b, t: (0, 0)),
        ],
        out_specs=pl.BlockSpec((B_blk, C_pad), lambda b, t: (b, 0)),
        scratch_shapes=[
            pltpu.VMEM((B_blk, H_pad), jnp.float32),   # h
            pltpu.VMEM((B_blk, H_pad), jnp.float32),   # c
        ],
    )

    out_p = pl.pallas_call(
        lstm_last_proj_kernel,
        out_shape=jax.ShapeDtypeStruct((B_pad, C_pad), jnp.float32),
        grid_spec=grid_spec,
        compiler_params=pltpu.CompilerParams(
            dimension_semantics=("parallel", "arbitrary"),
            vmem_limit_bytes=48 * 1024 * 1024,
        ),
    )(gx, w_hh_bf, w_proj, b_proj)

    return out_p[:batch, :char_size]


# ------------------------- Pure-JAX reference ---------------------------------
def text_lstm_reference(x, params):
    batch, seq_len, char_size = x.shape
    n_hidden = params["w_hh"].shape[1]
    w_ih_t = params["w_ih"].T
    w_hh_t = params["w_hh"].T
    b_gates = params["b_ih"] + params["b_hh"]

    def step(carry, x_t):
        h, c = carry
        gates = x_t @ w_ih_t + h @ w_hh_t + b_gates
        i = jax.nn.sigmoid(gates[:, 0 * n_hidden:1 * n_hidden])
        f = jax.nn.sigmoid(gates[:, 1 * n_hidden:2 * n_hidden])
        g = jnp.tanh(gates[:, 2 * n_hidden:3 * n_hidden])
        o = jax.nn.sigmoid(gates[:, 3 * n_hidden:4 * n_hidden])
        c_new = f * c + i * g
        h_new = o * jnp.tanh(c_new)
        return (h_new, c_new), None

    h0 = jnp.zeros((batch, n_hidden), jnp.float32)
    c0 = jnp.zeros((batch, n_hidden), jnp.float32)
    (h_last, _), _ = lax.scan(step, (h0, c0), jnp.transpose(x, (1, 0, 2)))
    return h_last @ params["W"] + params["b"]


# --------------------------------- Main ----------------------------------------
if __name__ == "__main__":
    # Module-implied hyperparameters (small synthetic sizes).
    batch = 4       # len(X)
    seq_len = 8     # n_step
    char_size = 16  # vocab / one-hot size
    n_hidden = 32

    key = jax.random.PRNGKey(0)
    k_x, k_wih, k_whh, k_bih, k_bhh, k_W, k_b = jax.random.split(key, 7)

    # Deterministic parameter init (shapes match nn.LSTM + W, b from __init__).
    params = {
        "w_ih": jax.random.normal(k_wih, (4 * n_hidden, char_size), jnp.float32) * 0.1,
        "w_hh": jax.random.normal(k_whh, (4 * n_hidden, n_hidden), jnp.float32) * 0.1,
        "b_ih": jax.random.normal(k_bih, (4 * n_hidden,), jnp.float32) * 0.1,
        "b_hh": jax.random.normal(k_bhh, (4 * n_hidden,), jnp.float32) * 0.1,
        "W": jax.random.normal(k_W, (n_hidden, char_size), jnp.float32),
        "b": jax.random.normal(k_b, (char_size,), jnp.float32),
    }

    x = jax.random.normal(k_x, (batch, seq_len, char_size), jnp.float32)

    out = jax.block_until_ready(text_lstm_forward(x, params))
    ref = jax.block_until_ready(text_lstm_reference(x, params))

    assert out.shape == (batch, char_size)
    # bf16 matmul operands + bf16 gx storage -> relaxed tolerance vs f32 reference.
    np.testing.assert_allclose(np.asarray(out), np.asarray(ref), rtol=3e-2, atol=3e-2)
    print("KERNEL_OK")
</pallas_src>

<mosaic_0001>
module attributes {stable_mosaic.version = 11 : i64} {
  func.func @lstm_last_proj_kernel(%arg0: i32, %arg1: i32, %arg2: memref<8x8x512xbf16, #tpu.memory_space<vmem>>, %arg3: memref<128x512xbf16, #tpu.memory_space<vmem>>, %arg4: memref<128x128xbf16, #tpu.memory_space<vmem>>, %arg5: memref<1x128xf32, #tpu.memory_space<vmem>>, %arg6: memref<8x128xf32, #tpu.memory_space<vmem>>, %arg7: memref<8x128xf32, #tpu.memory_space<vmem>>, %arg8: memref<8x128xf32, #tpu.memory_space<vmem>>) attributes {dimension_semantics = [#tpu.dimension_semantics<parallel>, #tpu.dimension_semantics<arbitrary>], iteration_bounds = array<i64: 1, 1>, scalar_prefetch = 0 : i64, scratch_operands = 2 : i64, tpu.core_type = #tpu.core_type<tc>, window_params = [{transform_indices = @transform_0, window_bounds = array<i64: 8, 8, 512>}, {pipeline_mode = #tpu.pipeline_mode<synchronous>, transform_indices = @transform_1, window_bounds = array<i64: 128, 512>}, {pipeline_mode = #tpu.pipeline_mode<synchronous>, transform_indices = @transform_2, window_bounds = array<i64: 128, 128>}, {pipeline_mode = #tpu.pipeline_mode<synchronous>, transform_indices = @transform_3, window_bounds = array<i64: 1, 128>}, {transform_indices = @transform_4, window_bounds = array<i64: 8, 128>}]} {
    %c0_i32 = arith.constant 0 : i32
    %0 = arith.cmpi eq, %arg1, %c0_i32 : i32
    %1 = arith.extui %0 : i1 to i32
    %c0_i32_0 = arith.constant 0 : i32
    %2 = arith.cmpi ne, %1, %c0_i32_0 : i32
    scf.if %2 {
      %cst_60 = arith.constant 0.000000e+00 : f32
      %211 = vector.broadcast %cst_60 : f32 to vector<8x128xf32>
      %c0_61 = arith.constant 0 : index
      %c0_62 = arith.constant 0 : index
      %212 = vector.load %arg7[%c0_61, %c0_62] : memref<8x128xf32, #tpu.memory_space<vmem>>, vector<8x128xf32>
      tpu.vector_store %arg7[%c0_61, %c0_62], %211 {strides = array<i32>} : memref<8x128xf32, #tpu.memory_space<vmem>>, vector<8x128xf32>,
      %cst_63 = arith.constant 0.000000e+00 : f32
      %213 = vector.broadcast %cst_63 : f32 to vector<8x128xf32>
      %c0_64 = arith.constant 0 : index
      %c0_65 = arith.constant 0 : index
      %214 = vector.load %arg8[%c0_64, %c0_65] : memref<8x128xf32, #tpu.memory_space<vmem>>, vector<8x128xf32>
      tpu.vector_store %arg8[%c0_64, %c0_65], %213 {strides = array<i32>} : memref<8x128xf32, #tpu.memory_space<vmem>>, vector<8x128xf32>,
    } else {
    }
    %c0 = arith.constant 0 : index
    %c0_1 = arith.constant 0 : index
    %3 = vector.load %arg3[%c0, %c0_1] : memref<128x512xbf16, #tpu.memory_space<vmem>>, vector<128x512xbf16>
    %c0_2 = arith.constant 0 : index
    %c0_3 = arith.constant 0 : index
    %4 = vector.load %arg7[%c0_2, %c0_3] : memref<8x128xf32, #tpu.memory_space<vmem>>, vector<8x128xf32>
    %c0_4 = arith.constant 0 : index
    %c0_5 = arith.constant 0 : index
    %5 = vector.load %arg8[%c0_4, %c0_5] : memref<8x128xf32, #tpu.memory_space<vmem>>, vector<8x128xf32>
    %c0_i32_6 = arith.constant 0 : i32
    %6 = arith.index_cast %c0_i32_6 : i32 to index
    %c0_7 = arith.constant 0 : index
    %c0_8 = arith.constant 0 : index
    %7 = vector.load %arg2[%6, %c0_7, %c0_8] : memref<8x8x512xbf16, #tpu.memory_space<vmem>>, vector<1x8x512xbf16>
    %8 = vector.shape_cast %7 : vector<1x8x512xbf16> to vector<8x512xbf16>
    %9 = arith.extf %8 : vector<8x512xbf16> to vector<8x512xf32>
    %10 = arith.truncf %4 : vector<8x128xf32> to vector<8x128xbf16>
    %cst = arith.constant dense<0.000000e+00> : vector<8x512xf32>
    %11 = tpu.matmul %10, %3, %cst {dimension_numbers = #tpu.dot_dimension_numbers<[1], [0], [0], [1], [0, 0, 1, 1], [], []>} : vector<8x128xbf16>, vector<128x512xbf16>, vector<8x512xf32> -> vector<8x512xf32>
    %12 = arith.addf %9, %11 : vector<8x512xf32>
    %13 = vector.extract_strided_slice %12 {offsets = [0, 0], sizes = [8, 384], strides = [1, 1]} : vector<8x512xf32> to vector<8x384xf32>
    %cst_9 = arith.constant 5.000000e-01 : f32
    %14 = vector.broadcast %cst_9 : f32 to vector<8x384xf32>
    %15 = arith.mulf %14, %13 : vector<8x384xf32>
    %16 = math.tanh %15 : vector<8x384xf32>
    %cst_10 = arith.constant 5.000000e-01 : f32
    %17 = vector.broadcast %cst_10 : f32 to vector<8x384xf32>
    %18 = arith.mulf %17, %16 : vector<8x384xf32>
    %cst_11 = arith.constant 5.000000e-01 : f32
    %19 = vector.broadcast %cst_11 : f32 to vector<8x384xf32>
    %20 = arith.addf %18, %19 : vector<8x384xf32>
    %21 = vector.extract_strided_slice %20 {offsets = [0, 0], sizes = [8, 128], strides = [1, 1]} : vector<8x384xf32> to vector<8x128xf32>
    %22 = vector.extract_strided_slice %20 {offsets = [0, 128], sizes = [8, 128], strides = [1, 1]} : vector<8x384xf32> to vector<8x128xf32>
    %23 = vector.extract_strided_slice %20 {offsets = [0, 256], sizes = [8, 128], strides = [1, 1]} : vector<8x384xf32> to vector<8x128xf32>
    %24 = vector.extract_strided_slice %12 {offsets = [0, 384], sizes = [8, 128], strides = [1, 1]} : vector<8x512xf32> to vector<8x128xf32>
    %25 = math.tanh %24 : vector<8x128xf32>
    %26 = arith.mulf %22, %5 : vector<8x128xf32>
    %27 = arith.mulf %21, %25 : vector<8x128xf32>
    %28 = arith.addf %26, %27 : vector<8x128xf32>
    %29 = math.tanh %28 : vector<8x128xf32>
    %30 = arith.mulf %23, %29 : vector<8x128xf32>
    %c1_i32 = arith.constant 1 : i32
    %31 = arith.index_cast %c1_i32 : i32 to index
    %c0_12 = arith.constant 0 : index
    %c0_13 = arith.constant 0 : index
    %32 = vector.load %arg2[%31, %c0_12, %c0_13] : memref<8x8x512xbf16, #tpu.memory_space<vmem>>, vector<1x8x512xbf16>
    %33 = vector.shape_cast %32 : vector<1x8x512xbf16> to vector<8x512xbf16>
    %34 = arith.extf %33 : vector<8x512xbf16> to vector<8x512xf32>
    %35 = arith.truncf %30 : vector<8x128xf32> to vector<8x128xbf16>
    %cst_14 = arith.constant dense<0.000000e+00> : vector<8x512xf32>
    %36 = tpu.matmul %35, %3, %cst_14 {dimension_numbers = #tpu.dot_dimension_numbers<[1], [0], [0], [1], [0, 0, 1, 1], [], []>} : vector<8x128xbf16>, vector<128x512xbf16>, vector<8x512xf32> -> vector<8x512xf32>
    %37 = arith.addf %34, %36 : vector<8x512xf32>
    %38 = vector.extract_strided_slice %37 {offsets = [0, 0], sizes = [8, 384], strides = [1, 1]} : vector<8x512xf32> to vector<8x384xf32>
    %cst_15 = arith.constant 5.000000e-01 : f32
    %39 = vector.broadcast %cst_15 : f32 to vector<8x384xf32>
    %40 = arith.mulf %39, %38 : vector<8x384xf32>
    %41 = math.tanh %40 : vector<8x384xf32>
    %cst_16 = arith.constant 5.000000e-01 : f32
    %42 = vector.broadcast %cst_16 : f32 to vector<8x384xf32>
    %43 = arith.mulf %42, %41 : vector<8x384xf32>
    %cst_17 = arith.constant 5.000000e-01 : f32
    %44 = vector.broadcast %cst_17 : f32 to vector<8x384xf32>
    %45 = arith.addf %43, %44 : vector<8x384xf32>
    %46 = vector.extract_strided_slice %45 {offsets = [0, 0], sizes = [8, 128], strides = [1, 1]} : vector<8x384xf32> to vector<8x128xf32>
    %47 = vector.extract_strided_slice %45 {offsets = [0, 128], sizes = [8, 128], strides = [1, 1]} : vector<8x384xf32> to vector<8x128xf32>
    %48 = vector.extract_strided_slice %45 {offsets = [0, 256], sizes = [8, 128], strides = [1, 1]} : vector<8x384xf32> to vector<8x128xf32>
    %49 = vector.extract_strided_slice %37 {offsets = [0, 384], sizes = [8, 128], strides = [1, 1]} : vector<8x512xf32> to vector<8x128xf32>
    %50 = math.tanh %49 : vector<8x128xf32>
    %51 = arith.mulf %47, %28 : vector<8x128xf32>
    %52 = arith.mulf %46, %50 : vector<8x128xf32>
    %53 = arith.addf %51, %52 : vector<8x128xf32>
    %54 = math.tanh %53 : vector<8x128xf32>
    %55 = arith.mulf %48, %54 : vector<8x128xf32>
    %c2_i32 = arith.constant 2 : i32
    %56 = arith.index_cast %c2_i32 : i32 to index
    %c0_18 = arith.constant 0 : index
    %c0_19 = arith.constant 0 : index
    %57 = vector.load %arg2[%56, %c0_18, %c0_19] : memref<8x8x512xbf16, #tpu.memory_space<vmem>>, vector<1x8x512xbf16>
    %58 = vector.shape_cast %57 : vector<1x8x512xbf16> to vector<8x512xbf16>
    %59 = arith.extf %58 : vector<8x512xbf16> to vector<8x512xf32>
    %60 = arith.truncf %55 : vector<8x128xf32> to vector<8x128xbf16>
    %cst_20 = arith.constant dense<0.000000e+00> : vector<8x512xf32>
    %61 = tpu.matmul %60, %3, %cst_20 {dimension_numbers = #tpu.dot_dimension_numbers<[1], [0], [0], [1], [0, 0, 1, 1], [], []>} : vector<8x128xbf16>, vector<128x512xbf16>, vector<8x512xf32> -> vector<8x512xf32>
    %62 = arith.addf %59, %61 : vector<8x512xf32>
    %63 = vector.extract_strided_slice %62 {offsets = [0, 0], sizes = [8, 384], strides = [1, 1]} : vector<8x512xf32> to vector<8x384xf32>
    %cst_21 = arith.constant 5.000000e-01 : f32
    %64 = vector.broadcast %cst_21 : f32 to vector<8x384xf32>
    %65 = arith.mulf %64, %63 : vector<8x384xf32>
    %66 = math.tanh %65 : vector<8x384xf32>
    %cst_22 = arith.constant 5.000000e-01 : f32
    %67 = vector.broadcast %cst_22 : f32 to vector<8x384xf32>
    %68 = arith.mulf %67, %66 : vector<8x384xf32>
    %cst_23 = arith.constant 5.000000e-01 : f32
    %69 = vector.broadcast %cst_23 : f32 to vector<8x384xf32>
    %70 = arith.addf %68, %69 : vector<8x384xf32>
    %71 = vector.extract_strided_slice %70 {offsets = [0, 0], sizes = [8, 128], strides = [1, 1]} : vector<8x384xf32> to vector<8x128xf32>
    %72 = vector.extract_strided_slice %70 {offsets = [0, 128], sizes = [8, 128], strides = [1, 1]} : vector<8x384xf32> to vector<8x128xf32>
    %73 = vector.extract_strided_slice %70 {offsets = [0, 256], sizes = [8, 128], strides = [1, 1]} : vector<8x384xf32> to vector<8x128xf32>
    %74 = vector.extract_strided_slice %62 {offsets = [0, 384], sizes = [8, 128], strides = [1, 1]} : vector<8x512xf32> to vector<8x128xf32>
    %75 = math.tanh %74 : vector<8x128xf32>
    %76 = arith.mulf %72, %53 : vector<8x128xf32>
    %77 = arith.mulf %71, %75 : vector<8x128xf32>
    %78 = arith.addf %76, %77 : vector<8x128xf32>
    %79 = math.tanh %78 : vector<8x128xf32>
    %80 = arith.mulf %73, %79 : vector<8x128xf32>
    %c3_i32 = arith.constant 3 : i32
    %81 = arith.index_cast %c3_i32 : i32 to index
    %c0_24 = arith.constant 0 : index
    %c0_25 = arith.constant 0 : index
    %82 = vector.load %arg2[%81, %c0_24, %c0_25] : memref<8x8x512xbf16, #tpu.memory_space<vmem>>, vector<1x8x512xbf16>
    %83 = vector.shape_cast %82 : vector<1x8x512xbf16> to vector<8x512xbf16>
    %84 = arith.extf %83 : vector<8x512xbf16> to vector<8x512xf32>
    %85 = arith.truncf %80 : vector<8x128xf32> to vector<8x128xbf16>
    %cst_26 = arith.constant dense<0.000000e+00> : vector<8x512xf32>
    %86 = tpu.matmul %85, %3, %cst_26 {dimension_numbers = #tpu.dot_dimension_numbers<[1], [0], [0], [1], [0, 0, 1, 1], [], []>} : vector<8x128xbf16>, vector<128x512xbf16>, vector<8x512xf32> -> vector<8x512xf32>
    %87 = arith.addf %84, %86 : vector<8x512xf32>
    %88 = vector.extract_strided_slice %87 {offsets = [0, 0], sizes = [8, 384], strides = [1, 1]} : vector<8x512xf32> to vector<8x384xf32>
    %cst_27 = arith.constant 5.000000e-01 : f32
    %89 = vector.broadcast %cst_27 : f32 to vector<8x384xf32>
    %90 = arith.mulf %89, %88 : vector<8x384xf32>
    %91 = math.tanh %90 : vector<8x384xf32>
    %cst_28 = arith.constant 5.000000e-01 : f32
    %92 = vector.broadcast %cst_28 : f32 to vector<8x384xf32>
    %93 = arith.mulf %92, %91 : vector<8x384xf32>
    %cst_29 = arith.constant 5.000000e-01 : f32
    %94 = vector.broadcast %cst_29 : f32 to vector<8x384xf32>
    %95 = arith.addf %93, %94 : vector<8x384xf32>
    %96 = vector.extract_strided_slice %95 {offsets = [0, 0], sizes = [8, 128], strides = [1, 1]} : vector<8x384xf32> to vector<8x128xf32>
    %97 = vector.extract_strided_slice %95 {offsets = [0, 128], sizes = [8, 128], strides = [1, 1]} : vector<8x384xf32> to vector<8x128xf32>
    %98 = vector.extract_strided_slice %95 {offsets = [0, 256], sizes = [8, 128], strides = [1, 1]} : vector<8x384xf32> to vector<8x128xf32>
    %99 = vector.extract_strided_slice %87 {offsets = [0, 384], sizes = [8, 128], strides = [1, 1]} : vector<8x512xf32> to vector<8x128xf32>
    %100 = math.tanh %99 : vector<8x128xf32>
    %101 = arith.mulf %97, %78 : vector<8x128xf32>
    %102 = arith.mulf %96, %100 : vector<8x128xf32>
    %103 = arith.addf %101, %102 : vector<8x128xf32>
    %104 = math.tanh %103 : vector<8x128xf32>
    %105 = arith.mulf %98, %104 : vector<8x128xf32>
    %c4_i32 = arith.constant 4 : i32
    %106 = arith.index_cast %c4_i32 : i32 to index
    %c0_30 = arith.constant 0 : index
    %c0_31 = arith.constant 0 : index
    %107 = vector.load %arg2[%106, %c0_30, %c0_31] : memref<8x8x512xbf16, #tpu.memory_space<vmem>>, vector<1x8x512xbf16>
    %108 = vector.shape_cast %107 : vector<1x8x512xbf16> to vector<8x512xbf16>
    %109 = arith.extf %108 : vector<8x512xbf16> to vector<8x512xf32>
    %110 = arith.truncf %105 : vector<8x128xf32> to vector<8x128xbf16>
    %cst_32 = arith.constant dense<0.000000e+00> : vector<8x512xf32>
    %111 = tpu.matmul %110, %3, %cst_32 {dimension_numbers = #tpu.dot_dimension_numbers<[1], [0], [0], [1], [0, 0, 1, 1], [], []>} : vector<8x128xbf16>, vector<128x512xbf16>, vector<8x512xf32> -> vector<8x512xf32>
    %112 = arith.addf %109, %111 : vector<8x512xf32>
    %113 = vector.extract_strided_slice %112 {offsets = [0, 0], sizes = [8, 384], strides = [1, 1]} : vector<8x512xf32> to vector<8x384xf32>
    %cst_33 = arith.constant 5.000000e-01 : f32
    %114 = vector.broadcast %cst_33 : f32 to vector<8x384xf32>
    %115 = arith.mulf %114, %113 : vector<8x384xf32>
    %116 = math.tanh %115 : vector<8x384xf32>
    %cst_34 = arith.constant 5.000000e-01 : f32
    %117 = vector.broadcast %cst_34 : f32 to vector<8x384xf32>
    %118 = arith.mulf %117, %116 : vector<8x384xf32>
    %cst_35 = arith.constant 5.000000e-01 : f32
    %119 = vector.broadcast %cst_35 : f32 to vector<8x384xf32>
    %120 = arith.addf %118, %119 : vector<8x384xf32>
    %121 = vector.extract_strided_slice %120 {offsets = [0, 0], sizes = [8, 128], strides = [1, 1]} : vector<8x384xf32> to vector<8x128xf32>
    %122 = vector.extract_strided_slice %120 {offsets = [0, 128], sizes = [8, 128], strides = [1, 1]} : vector<8x384xf32> to vector<8x128xf32>
    %123 = vector.extract_strided_slice %120 {offsets = [0, 256], sizes = [8, 128], strides = [1, 1]} : vector<8x384xf32> to vector<8x128xf32>
    %124 = vector.extract_strided_slice %112 {offsets = [0, 384], sizes = [8, 128], strides = [1, 1]} : vector<8x512xf32> to vector<8x128xf32>
    %125 = math.tanh %124 : vector<8x128xf32>
    %126 = arith.mulf %122, %103 : vector<8x128xf32>
    %127 = arith.mulf %121, %125 : vector<8x128xf32>
    %128 = arith.addf %126, %127 : vector<8x128xf32>
    %129 = math.tanh %128 : vector<8x128xf32>
    %130 = arith.mulf %123, %129 : vector<8x128xf32>
    %c5_i32 = arith.constant 5 : i32
    %131 = arith.index_cast %c5_i32 : i32 to index
    %c0_36 = arith.constant 0 : index
    %c0_37 = arith.constant 0 : index
    %132 = vector.load %arg2[%131, %c0_36, %c0_37] : memref<8x8x512xbf16, #tpu.memory_space<vmem>>, vector<1x8x512xbf16>
    %133 = vector.shape_cast %132 : vector<1x8x512xbf16> to vector<8x512xbf16>
    %134 = arith.extf %133 : vector<8x512xbf16> to vector<8x512xf32>
    %135 = arith.truncf %130 : vector<8x128xf32> to vector<8x128xbf16>
    %cst_38 = arith.constant dense<0.000000e+00> : vector<8x512xf32>
    %136 = tpu.matmul %135, %3, %cst_38 {dimension_numbers = #tpu.dot_dimension_numbers<[1], [0], [0], [1], [0, 0, 1, 1], [], []>} : vector<8x128xbf16>, vector<128x512xbf16>, vector<8x512xf32> -> vector<8x512xf32>
    %137 = arith.addf %134, %136 : vector<8x512xf32>
    %138 = vector.extract_strided_slice %137 {offsets = [0, 0], sizes = [8, 384], strides = [1, 1]} : vector<8x512xf32> to vector<8x384xf32>
    %cst_39 = arith.constant 5.000000e-01 : f32
    %139 = vector.broadcast %cst_39 : f32 to vector<8x384xf32>
    %140 = arith.mulf %139, %138 : vector<8x384xf32>
    %141 = math.tanh %140 : vector<8x384xf32>
    %cst_40 = arith.constant 5.000000e-01 : f32
    %142 = vector.broadcast %cst_40 : f32 to vector<8x384xf32>
    %143 = arith.mulf %142, %141 : vector<8x384xf32>
    %cst_41 = arith.constant 5.000000e-01 : f32
    %144 = vector.broadcast %cst_41 : f32 to vector<8x384xf32>
    %145 = arith.addf %143, %144 : vector<8x384xf32>
    %146 = vector.extract_strided_slice %145 {offsets = [0, 0], sizes = [8, 128], strides = [1, 1]} : vector<8x384xf32> to vector<8x128xf32>
    %147 = vector.extract_strided_slice %145 {offsets = [0, 128], sizes = [8, 128], strides = [1, 1]} : vector<8x384xf32> to vector<8x128xf32>
    %148 = vector.extract_strided_slice %145 {offsets = [0, 256], sizes = [8, 128], strides = [1, 1]} : vector<8x384xf32> to vector<8x128xf32>
    %149 = vector.extract_strided_slice %137 {offsets = [0, 384], sizes = [8, 128], strides = [1, 1]} : vector<8x512xf32> to vector<8x128xf32>
    %150 = math.tanh %149 : vector<8x128xf32>
    %151 = arith.mulf %147, %128 : vector<8x128xf32>
    %152 = arith.mulf %146, %150 : vector<8x128xf32>
    %153 = arith.addf %151, %152 : vector<8x128xf32>
    %154 = math.tanh %153 : vector<8x128xf32>
    %155 = arith.mulf %148, %154 : vector<8x128xf32>
    %c6_i32 = arith.constant 6 : i32
    %156 = arith.index_cast %c6_i32 : i32 to index
    %c0_42 = arith.constant 0 : index
    %c0_43 = arith.constant 0 : index
    %157 = vector.load %arg2[%156, %c0_42, %c0_43] : memref<8x8x512xbf16, #tpu.memory_space<vmem>>, vector<1x8x512xbf16>
    %158 = vector.shape_cast %157 : vector<1x8x512xbf16> to vector<8x512xbf16>
    %159 = arith.extf %158 : vector<8x512xbf16> to vector<8x512xf32>
    %160 = arith.truncf %155 : vector<8x128xf32> to vector<8x128xbf16>
    %cst_44 = arith.constant dense<0.000000e+00> : vector<8x512xf32>
    %161 = tpu.matmul %160, %3, %cst_44 {dimension_numbers = #tpu.dot_dimension_numbers<[1], [0], [0], [1], [0, 0, 1, 1], [], []>} : vector<8x128xbf16>, vector<128x512xbf16>, vector<8x512xf32> -> vector<8x512xf32>
    %162 = arith.addf %159, %161 : vector<8x512xf32>
    %163 = vector.extract_strided_slice %162 {offsets = [0, 0], sizes = [8, 384], strides = [1, 1]} : vector<8x512xf32> to vector<8x384xf32>
    %cst_45 = arith.constant 5.000000e-01 : f32
    %164 = vector.broadcast %cst_45 : f32 to vector<8x384xf32>
    %165 = arith.mulf %164, %163 : vector<8x384xf32>
    %166 = math.tanh %165 : vector<8x384xf32>
    %cst_46 = arith.constant 5.000000e-01 : f32
    %167 = vector.broadcast %cst_46 : f32 to vector<8x384xf32>
    %168 = arith.mulf %167, %166 : vector<8x384xf32>
    %cst_47 = arith.constant 5.000000e-01 : f32
    %169 = vector.broadcast %cst_47 : f32 to vector<8x384xf32>
    %170 = arith.addf %168, %169 : vector<8x384xf32>
    %171 = vector.extract_strided_slice %170 {offsets = [0, 0], sizes = [8, 128], strides = [1, 1]} : vector<8x384xf32> to vector<8x128xf32>
    %172 = vector.extract_strided_slice %170 {offsets = [0, 128], sizes = [8, 128], strides = [1, 1]} : vector<8x384xf32> to vector<8x128xf32>
    %173 = vector.extract_strided_slice %170 {offsets = [0, 256], sizes = [8, 128], strides = [1, 1]} : vector<8x384xf32> to vector<8x128xf32>
    %174 = vector.extract_strided_slice %162 {offsets = [0, 384], sizes = [8, 128], strides = [1, 1]} : vector<8x512xf32> to vector<8x128xf32>
    %175 = math.tanh %174 : vector<8x128xf32>
    %176 = arith.mulf %172, %153 : vector<8x128xf32>
    %177 = arith.mulf %171, %175 : vector<8x128xf32>
    %178 = arith.addf %176, %177 : vector<8x128xf32>
    %179 = math.tanh %178 : vector<8x128xf32>
    %180 = arith.mulf %173, %179 : vector<8x128xf32>
    %c7_i32 = arith.constant 7 : i32
    %181 = arith.index_cast %c7_i32 : i32 to index
    %c0_48 = arith.constant 0 : index
    %c0_49 = arith.constant 0 : index
    %182 = vector.load %arg2[%181, %c0_48, %c0_49] : memref<8x8x512xbf16, #tpu.memory_space<vmem>>, vector<1x8x512xbf16>
    %183 = vector.shape_cast %182 : vector<1x8x512xbf16> to vector<8x512xbf16>
    %184 = arith.extf %183 : vector<8x512xbf16> to vector<8x512xf32>
    %185 = arith.truncf %180 : vector<8x128xf32> to vector<8x128xbf16>
    %cst_50 = arith.constant dense<0.000000e+00> : vector<8x512xf32>
    %186 = tpu.matmul %185, %3, %cst_50 {dimension_numbers = #tpu.dot_dimension_numbers<[1], [0], [0], [1], [0, 0, 1, 1], [], []>} : vector<8x128xbf16>, vector<128x512xbf16>, vector<8x512xf32> -> vector<8x512xf32>
    %187 = arith.addf %184, %186 : vector<8x512xf32>
    %188 = vector.extract_strided_slice %187 {offsets = [0, 0], sizes = [8, 384], strides = [1, 1]} : vector<8x512xf32> to vector<8x384xf32>
    %cst_51 = arith.constant 5.000000e-01 : f32
    %189 = vector.broadcast %cst_51 : f32 to vector<8x384xf32>
    %190 = arith.mulf %189, %188 : vector<8x384xf32>
    %191 = math.tanh %190 : vector<8x384xf32>
    %cst_52 = arith.constant 5.000000e-01 : f32
    %192 = vector.broadcast %cst_52 : f32 to vector<8x384xf32>
    %193 = arith.mulf %192, %191 : vector<8x384xf32>
    %cst_53 = arith.constant 5.000000e-01 : f32
    %194 = vector.broadcast %cst_53 : f32 to vector<8x384xf32>
    %195 = arith.addf %193, %194 : vector<8x384xf32>
    %196 = vector.extract_strided_slice %195 {offsets = [0, 0], sizes = [8, 128], strides = [1, 1]} : vector<8x384xf32> to vector<8x128xf32>
    %197 = vector.extract_strided_slice %195 {offsets = [0, 128], sizes = [8, 128], strides = [1, 1]} : vector<8x384xf32> to vector<8x128xf32>
    %198 = vector.extract_strided_slice %195 {offsets = [0, 256], sizes = [8, 128], strides = [1, 1]} : vector<8x384xf32> to vector<8x128xf32>
    %199 = vector.extract_strided_slice %187 {offsets = [0, 384], sizes = [8, 128], strides = [1, 1]} : vector<8x512xf32> to vector<8x128xf32>
    %200 = math.tanh %199 : vector<8x128xf32>
    %201 = arith.mulf %197, %178 : vector<8x128xf32>
    %202 = arith.mulf %196, %200 : vector<8x128xf32>
    %203 = arith.addf %201, %202 : vector<8x128xf32>
    %204 = math.tanh %203 : vector<8x128xf32>
    %205 = arith.mulf %198, %204 : vector<8x128xf32>
    %c8_i32 = arith.constant 8 : i32
    %c0_54 = arith.constant 0 : index
    %c0_55 = arith.constant 0 : index
    %206 = vector.load %arg7[%c0_54, %c0_55] : memref<8x128xf32, #tpu.memory_space<vmem>>, vector<8x128xf32>
    tpu.vector_store %arg7[%c0_54, %c0_55], %205 {strides = array<i32>} : memref<8x128xf32, #tpu.memory_space<vmem>>, vector<8x128xf32>,
    %c0_56 = arith.constant 0 : index
    %c0_57 = arith.constant 0 : index
    %207 = vector.load %arg8[%c0_56, %c0_57] : memref<8x128xf32, #tpu.memory_space<vmem>>, vector<8x128xf32>
    tpu.vector_store %arg8[%c0_56, %c0_57], %203 {strides = array<i32>} : memref<8x128xf32, #tpu.memory_space<vmem>>, vector<8x128xf32>,
    %c0_i32_58 = arith.constant 0 : i32
    %208 = arith.cmpi eq, %arg1, %c0_i32_58 : i32
    %209 = arith.extui %208 : i1 to i32
    %c0_i32_59 = arith.constant 0 : i32
    %210 = arith.cmpi ne, %209, %c0_i32_59 : i32
    scf.if %210 {
      %211 = arith.truncf %205 : vector<8x128xf32> to vector<8x128xbf16>
      %c0_60 = arith.constant 0 : index
      %c0_61 = arith.constant 0 : index
      %212 = vector.load %arg4[%c0_60, %c0_61] : memref<128x128xbf16, #tpu.memory_space<vmem>>, vector<128x128xbf16>
      %cst_62 = arith.constant dense<0.000000e+00> : vector<8x128xf32>
      %213 = tpu.matmul %211, %212, %cst_62 {dimension_numbers = #tpu.dot_dimension_numbers<[1], [0], [0], [1], [0, 0, 1, 1], [], []>} : vector<8x128xbf16>, vector<128x128xbf16>, vector<8x128xf32> -> vector<8x128xf32>
      %c0_63 = arith.constant 0 : index
      %c0_64 = arith.constant 0 : index
      %214 = vector.load %arg5[%c0_63, %c0_64] : memref<1x128xf32, #tpu.memory_space<vmem>>, vector<1x128xf32>
      %215 = vector.broadcast %214 : vector<1x128xf32> to vector<8x128xf32>
      %216 = arith.addf %213, %215 : vector<8x128xf32>
      %c0_65 = arith.constant 0 : index
      %c0_66 = arith.constant 0 : index
      %217 = vector.load %arg6[%c0_65, %c0_66] : memref<8x128xf32, #tpu.memory_space<vmem>>, vector<8x128xf32>
      tpu.vector_store %arg6[%c0_65, %c0_66], %216 {strides = array<i32>} : memref<8x128xf32, #tpu.memory_space<vmem>>, vector<8x128xf32>,
    } else {
    }
    return
  }
  func.func @transform_0(%arg0: i32, %arg1: i32) -> (i32, i32, i32) {
    %c0_i32 = arith.constant 0 : i32
    %c0_i32_0 = arith.constant 0 : i32
    return %arg1, %arg0, %c0_i32 : i32, i32, i32
  }
  func.func @transform_1(%arg0: i32, %arg1: i32) -> (i32, i32) {
    %c0_i32 = arith.constant 0 : i32
    %c0_i32_0 = arith.constant 0 : i32
    %c0_i32_1 = arith.constant 0 : i32
    return %c0_i32, %c0_i32_0 : i32, i32
  }
  func.func @transform_2(%arg0: i32, %arg1: i32) -> (i32, i32) {
    %c0_i32 = arith.constant 0 : i32
    %c0_i32_0 = arith.constant 0 : i32
    %c0_i32_1 = arith.constant 0 : i32
    return %c0_i32, %c0_i32_0 : i32, i32
  }
  func.func @transform_3(%arg0: i32, %arg1: i32) -> (i32, i32) {
    %c0_i32 = arith.constant 0 : i32
    %c0_i32_0 = arith.constant 0 : i32
    %c0_i32_1 = arith.constant 0 : i32
    return %c0_i32, %c0_i32_0 : i32, i32
  }
  func.func @transform_4(%arg0: i32, %arg1: i32) -> (i32, i32) {
    %c0_i32 = arith.constant 0 : i32
    %c0_i32_0 = arith.constant 0 : i32
    return %arg0, %c0_i32 : i32, i32
  }
}

</mosaic_0001>

<llo_original>
// kernel: tpu_custom_call.1
$region0: #{tpu_custom_call.1}
  #allocation0 [shape = 'u32[]', space=smem, size = 0x4, offset = 0x4, fixed_abs, tag = 'smem constant byte address 0x4 - core index']
  #allocation1 [shape = 'u32[72,128]{1,0:T(1,128)}', space=vmem, size = 0x9000, scoped, tag = 'internal scratch']
  #allocation2 [shape = 'f32[8,128]{1,0:T(8,128)}', space=vmem, size = 0x1000, scoped, tag = 'scratch operand']
  #allocation3 [shape = 'f32[8,128]{1,0:T(8,128)}', space=vmem, size = 0x1000, scoped, tag = 'scratch operand']
  %s0 = inlined_call_operand.hbm [shape: bf16[8,8,512], index: 0, kind: input, shape index: {}]
  %s1 = inlined_call_operand.hbm [shape: bf16[128,512], index: 1, kind: input, shape index: {}]
  %s2 = inlined_call_operand.hbm [shape: bf16[128,128], index: 2, kind: input, shape index: {}]
  %s3 = inlined_call_operand.vmem [shape: f32[1,128], index: 3, kind: input, shape index: {}]
  %s4 = inlined_call_operand.hbm [shape: f32[8,128], index: 4, kind: output, shape index: {}]
  %s5 = sld [smem:[#allocation0]]
  $region46: #{tpu_custom_call.1} parent=0
    _
  %s7 = ssub.s32 1, %s5
  %s8 = scalar_select 0, %s7, %s5
  $region1: #{tpu_custom_call.1} parent=0
    #allocation4 [shape = 'u8[65536]{0}', space=vmem, size = 0x10000, scoped, tag = 'input window, operand 0, single buffered']
    #allocation5 [shape = 's32[1]{0}', space=sflag, size = 0x4, scoped, tag = 'scoped memory for tpu_custom_call.1']
    #allocation6 [shape = 's32[1]{0}', space=sflag, size = 0x4, scoped, tag = 'scoped memory for tpu_custom_call.1']
    #allocation7 [shape = 'u8[131072]{0}', space=vmem, size = 0x20000, scoped, tag = 'input window, operand 1, single buffered']
    #allocation8 [shape = 's32[1]{0}', space=sflag, size = 0x4, scoped, tag = 'scoped memory for tpu_custom_call.1']
    #allocation9 [shape = 'u8[32768]{0}', space=vmem, size = 0x8000, scoped, tag = 'input window, operand 2, single buffered']
    #allocation10 [shape = 'u8[4096]{0}', space=vmem, size = 0x1000, scoped, tag = 'output window, operand 0, single buffered']
    %9 = vsyncpa [#allocation5], 0
    %10 = vsyncpa [#allocation8], 0
    %11 = vsyncpa [#allocation6], 0
    // Predicated region
    $region2: #{tpu_custom_call.1} parent=1 // pred_check
      _
    $region3: #{tpu_custom_call.1} parent=1 // pred_check_branch
      %13 = sbr.rel (0) target = $region5
    $region4: #{tpu_custom_call.1} parent=1 // pred_region
      %15 = vsyncadd [#allocation5], 0
      %s16 = sshll.u32 %s0, 4
      %s17 = int_to_ptr.hbm [resolvable:$true] %s16
      %s18 = sshll.u32 [#allocation4], 4
      %s19 = int_to_ptr.vmem [resolvable:$true] %s18
      %24 = dma.hbm_to_vmem [thread:$0]  %s17, 2048, %s19, [#allocation5], 256, 256, 16
    $region5: #{tpu_custom_call.1} parent=1 // pred_fallthru
      _
    // Predicated region
    $region6: #{tpu_custom_call.1} parent=1 // pred_check
      _
    $region7: #{tpu_custom_call.1} parent=1 // pred_check_branch
      %26 = sbr.rel (0) target = $region9
    $region8: #{tpu_custom_call.1} parent=1 // pred_region
      %28 = vsyncadd [#allocation8], 0
      %s29 = sshll.u32 %s1, 4
      %s30 = int_to_ptr.hbm [resolvable:$true] %s29
      %s31 = sshll.u32 [#allocation7], 4
      %s32 = int_to_ptr.vmem [resolvable:$true] %s31
      %37 = dma.hbm_to_vmem [thread:$0]  %s30, 4096, %s32, [#allocation8], 256, 256, 16
    $region9: #{tpu_custom_call.1} parent=1 // pred_fallthru
      _
    // Predicated region
    $region10: #{tpu_custom_call.1} parent=1 // pred_check
      _
    $region11: #{tpu_custom_call.1} parent=1 // pred_check_branch
      %39 = sbr.rel (0) target = $region13
    $region12: #{tpu_custom_call.1} parent=1 // pred_region
      %41 = vsyncadd [#allocation8], 0
      %s42 = sshll.u32 %s2, 4
      %s43 = int_to_ptr.hbm [resolvable:$true] %s42
      %s44 = sshll.u32 [#allocation9], 4
      %s45 = int_to_ptr.vmem [resolvable:$true] %s44
      %50 = dma.hbm_to_vmem [thread:$0]  %s43, 1024, %s45, [#allocation8], 64, 64, 4
    $region13: #{tpu_custom_call.1} parent=1 // pred_fallthru
      _
    // Predicated region
    $region14: #{tpu_custom_call.1} parent=1 // pred_check
      _
    $region15: #{tpu_custom_call.1} parent=1 // pred_check_branch
      %52 = sbr.rel (0) target = $region17
    $region16: #{tpu_custom_call.1} parent=1 // pred_region
      _
    $region17: #{tpu_custom_call.1} parent=1 // pred_fallthru
      _
    // Predicated region
    $region18: #{tpu_custom_call.1} parent=1 // pred_check
      _
    $region19: #{tpu_custom_call.1} parent=1 // pred_check_branch
      %54 = sbr.rel (0) target = $region21
    $region20: #{tpu_custom_call.1} parent=1 // pred_region
      %56 = dma.done [#allocation5], 2048
    $region21: #{tpu_custom_call.1} parent=1 // pred_fallthru
      _
    // Predicated region
    $region22: #{tpu_custom_call.1} parent=1 // pred_check
      _
    $region23: #{tpu_custom_call.1} parent=1 // pred_check_branch
      %58 = sbr.rel (0) target = $region25
    $region24: #{tpu_custom_call.1} parent=1 // pred_region
      %60 = dma.done [#allocation8], 4096
    $region25: #{tpu_custom_call.1} parent=1 // pred_fallthru
      _
    // Predicated region
    $region26: #{tpu_custom_call.1} parent=1 // pred_check
      _
    $region27: #{tpu_custom_call.1} parent=1 // pred_check_branch
      %62 = sbr.rel (0) target = $region29
    $region28: #{tpu_custom_call.1} parent=1 // pred_region
      %64 = dma.done [#allocation8], 1024
    $region29: #{tpu_custom_call.1} parent=1 // pred_fallthru
      _
    %p65 = scmp.eq.s32.totalorder 0, 0
    // Predicated region
    $region30: #{tpu_custom_call.1} parent=1 // pred_check
      %p66 = pneg %p65
    $region31: #{tpu_custom_call.1} parent=1 // pred_check_branch
      %68 = sbr.rel (%p66) target = $region33
    $region32: #{tpu_custom_call.1} parent=1 // pred_region
      %69 = vst [vmem:[#allocation2] sm:$0xff] 0.0
      %70 = vst [vmem:[#allocation3] sm:$0xff] 0.0
    $region33: #{tpu_custom_call.1} parent=1 // pred_fallthru
      _
    %v71 = vld [vmem:[#allocation7] sm:$0xff]
    %v72 = vld [vmem:[#allocation7 + $0x8] sm:$0xff]
    %v73 = vld [vmem:[#allocation7 + $0x10] sm:$0xff]
    %v74 = vld [vmem:[#allocation7 + $0x18] sm:$0xff]
    %v75 = vld [vmem:[#allocation7 + $0x20] sm:$0xff]
    %v76 = vld [vmem:[#allocation7 + $0x28] sm:$0xff]
    %v77 = vld [vmem:[#allocation7 + $0x30] sm:$0xff]
    %v78 = vld [vmem:[#allocation7 + $0x38] sm:$0xff]
    %v79 = vld [vmem:[#allocation7 + $0x40] sm:$0xff]
    %v80 = vld [vmem:[#allocation7 + $0x48] sm:$0xff]
    %v81 = vld [vmem:[#allocation7 + $0x50] sm:$0xff]
    %v82 = vld [vmem:[#allocation7 + $0x58] sm:$0xff]
    %v83 = vld [vmem:[#allocation7 + $0x60] sm:$0xff]
    %v84 = vld [vmem:[#allocation7 + $0x68] sm:$0xff]
    %v85 = vld [vmem:[#allocation7 + $0x70] sm:$0xff]
    %v86 = vld [vmem:[#allocation7 + $0x78] sm:$0xff]
    %v87 = vld [vmem:[#allocation7 + $0x80] sm:$0xff]
    %v88 = vld [vmem:[#allocation7 + $0x88] sm:$0xff]
    %v89 = vld [vmem:[#allocation7 + $0x90] sm:$0xff]
    %v90 = vld [vmem:[#allocation7 + $0x98] sm:$0xff]
    %v91 = vld [vmem:[#allocation7 + $0xa0] sm:$0xff]
    %v92 = vld [vmem:[#allocation7 + $0xa8] sm:$0xff]
    %v93 = vld [vmem:[#allocation7 + $0xb0] sm:$0xff]
    %v94 = vld [vmem:[#allocation7 + $0xb8] sm:$0xff]
    %v95 = vld [vmem:[#allocation7 + $0xc0] sm:$0xff]
    %v96 = vld [vmem:[#allocation7 + $0xc8] sm:$0xff]
    %v97 = vld [vmem:[#allocation7 + $0xd0] sm:$0xff]
    %v98 = vld [vmem:[#allocation7 + $0xd8] sm:$0xff]
    %v99 = vld [vmem:[#allocation7 + $0xe0] sm:$0xff]
    %v100 = vld [vmem:[#allocation7 + $0xe8] sm:$0xff]
    %v101 = vld [vmem:[#allocation7 + $0xf0] sm:$0xff]
    %v102 = vld [vmem:[#allocation7 + $0xf8] sm:$0xff]
    %v103 = vld [vmem:[#allocation2] sm:$0xff]
    %v104 = vld [vmem:[#allocation3] sm:$0xff]
    %v105 = vld [vmem:[#allocation4] sm:$0xff]
    %v106 = vld [vmem:[#allocation4 + $0x8] sm:$0xff]
    %v107 = vunpack.c.l.bf16 %v105
    %v108 = vunpack.c.h.bf16 %v105
    %v109 = vunpack.c.l.bf16 %v106
    %v110 = vunpack.c.h.bf16 %v106
    %v111 = vpack.c.bf16 %v103, %v103
    %v144 = vunpack.c.l.b16 %v71
    %v145 = vunpack.c.h.b16 %v71
    %v146 = vunpack.c.l.b16 %v72
    %v147 = vunpack.c.h.b16 %v72
    %v148 = vunpack.c.l.b16 %v73
    %v149 = vunpack.c.h.b16 %v73
    %v150 = vunpack.c.l.b16 %v74
    %v151 = vunpack.c.h.b16 %v74
    %v152 = vunpack.c.l.b16 %v75
    %v153 = vunpack.c.h.b16 %v75
    %v154 = vunpack.c.l.b16 %v76
    %v155 = vunpack.c.h.b16 %v76
    %v156 = vunpack.c.l.b16 %v77
    %v157 = vunpack.c.h.b16 %v77
    %v158 = vunpack.c.l.b16 %v78
    %v159 = vunpack.c.h.b16 %v78
    %v160 = vunpack.c.l.b16 %v79
    %v161 = vunpack.c.h.b16 %v79
    %v162 = vunpack.c.l.b16 %v80
    %v163 = vunpack.c.h.b16 %v80
    %v164 = vunpack.c.l.b16 %v81
    %v165 = vunpack.c.h.b16 %v81
    %v166 = vunpack.c.l.b16 %v82
    %v167 = vunpack.c.h.b16 %v82
    %v168 = vunpack.c.l.b16 %v83
    %v169 = vunpack.c.h.b16 %v83
    %v170 = vunpack.c.l.b16 %v84
    %v171 = vunpack.c.h.b16 %v84
    %v172 = vunpack.c.l.b16 %v85
    %v173 = vunpack.c.h.b16 %v85
    %v174 = vunpack.c.l.b16 %v86
    %v175 = vunpack.c.h.b16 %v86
    %v176 = vunpack.c.l.b16 %v87
    %v177 = vunpack.c.h.b16 %v87
    %v178 = vunpack.c.l.b16 %v88
    %v179 = vunpack.c.h.b16 %v88
    %v180 = vunpack.c.l.b16 %v89
    %v181 = vunpack.c.h.b16 %v89
    %v182 = vunpack.c.l.b16 %v90
    %v183 = vunpack.c.h.b16 %v90
    %v184 = vunpack.c.l.b16 %v91
    %v185 = vunpack.c.h.b16 %v91
    %v186 = vunpack.c.l.b16 %v92
    %v187 = vunpack.c.h.b16 %v92
    %v188 = vunpack.c.l.b16 %v93
    %v189 = vunpack.c.h.b16 %v93
    %v190 = vunpack.c.l.b16 %v94
    %v191 = vunpack.c.h.b16 %v94
    %v192 = vunpack.c.l.b16 %v95
    %v193 = vunpack.c.h.b16 %v95
    %v194 = vunpack.c.l.b16 %v96
    %v195 = vunpack.c.h.b16 %v96
    %v196 = vunpack.c.l.b16 %v97
    %v197 = vunpack.c.h.b16 %v97
    %v198 = vunpack.c.l.b16 %v98
    %v199 = vunpack.c.h.b16 %v98
    %v200 = vunpack.c.l.b16 %v99
    %v201 = vunpack.c.h.b16 %v99
    %v202 = vunpack.c.l.b16 %v100
    %v203 = vunpack.c.h.b16 %v100
    %v204 = vunpack.c.l.b16 %v101
    %v205 = vunpack.c.h.b16 %v101
    %v206 = vunpack.c.l.b16 %v102
    %v207 = vunpack.c.h.b16 %v102
    %v208 = vpack.c.b16 %v148, %v144
    %v209 = vpack.c.b16 %v149, %v145
    %v210 = vpack.c.b16 %v150, %v146
    %v211 = vpack.c.b16 %v151, %v147
    %v212 = vpack.c.b16 %v156, %v152
    %v213 = vpack.c.b16 %v157, %v153
    %v214 = vpack.c.b16 %v158, %v154
    %v215 = vpack.c.b16 %v159, %v155
    %v216 = vpack.c.b16 %v164, %v160
    %v217 = vpack.c.b16 %v165, %v161
    %v218 = vpack.c.b16 %v166, %v162
    %v219 = vpack.c.b16 %v167, %v163
    %v220 = vpack.c.b16 %v172, %v168
    %v221 = vpack.c.b16 %v173, %v169
    %v222 = vpack.c.b16 %v174, %v170
    %v223 = vpack.c.b16 %v175, %v171
    %v224 = vpack.c.b16 %v180, %v176
    %v225 = vpack.c.b16 %v181, %v177
    %v226 = vpack.c.b16 %v182, %v178
    %v227 = vpack.c.b16 %v183, %v179
    %v228 = vpack.c.b16 %v188, %v184
    %v229 = vpack.c.b16 %v189, %v185
    %v230 = vpack.c.b16 %v190, %v186
    %v231 = vpack.c.b16 %v191, %v187
    %v232 = vpack.c.b16 %v196, %v192
    %v233 = vpack.c.b16 %v197, %v193
    %v234 = vpack.c.b16 %v198, %v194
    %v235 = vpack.c.b16 %v199, %v195
    %v236 = vpack.c.b16 %v204, %v200
    %v237 = vpack.c.b16 %v205, %v201
    %v238 = vpack.c.b16 %v206, %v202
    %v239 = vpack.c.b16 %v207, %v203
    %272 = vmatpush.bf16.msra.mxu0 %v236
    %273 = vmatpush.bf16.msra.mxu0 %v232
    %274 = vmatpush.bf16.msra.mxu0 %v228
    %275 = vmatpush.bf16.msra.mxu0 %v224
    %276 = vmatpush.bf16.msra.mxu0 %v220
    %277 = vmatpush.bf16.msra.mxu0 %v216
    %278 = vmatpush.bf16.msra.mxu0 %v212
    %279 = vmatpush.bf16.msra.mxu0 %v208
    %280 = vmatmul.bf16.gmra.mxu0 %v111
    %v281 = vpop.f32.mrf.mxu0
    %v282 = vadd.f32 0.0, %v281
    %v283 = vpop.f32.mrf.mxu0
    %284 = vdwg.mxu0
    %285 = vmatpush.bf16.msra.mxu0 %v237
    %286 = vmatpush.bf16.msra.mxu0 %v233
    %287 = vmatpush.bf16.msra.mxu0 %v229
    %288 = vmatpush.bf16.msra.mxu0 %v225
    %289 = vmatpush.bf16.msra.mxu0 %v221
    %290 = vmatpush.bf16.msra.mxu0 %v217
    %291 = vmatpush.bf16.msra.mxu0 %v213
    %292 = vmatpush.bf16.msra.mxu0 %v209
    %293 = vmatmul.bf16.gmra.mxu0 %v111
    %v294 = vpop.f32.mrf.mxu0
    %v295 = vadd.f32 0.0, %v294
    %v296 = vpop.f32.mrf.mxu0
    %297 = vdwg.mxu0
    %298 = vmatpush.bf16.msra.mxu0 %v238
    %299 = vmatpush.bf16.msra.mxu0 %v234
    %300 = vmatpush.bf16.msra.mxu0 %v230
    %301 = vmatpush.bf16.msra.mxu0 %v226
    %302 = vmatpush.bf16.msra.mxu0 %v222
    %303 = vmatpush.bf16.msra.mxu0 %v218
    %304 = vmatpush.bf16.msra.mxu0 %v214
    %305 = vmatpush.bf16.msra.mxu0 %v210
    %306 = vmatmul.bf16.gmra.mxu0 %v111
    %v307 = vpop.f32.mrf.mxu0
    %v308 = vadd.f32 0.0, %v307
    %v309 = vpop.f32.mrf.mxu0
    %310 = vdwg.mxu0
    %311 = vmatpush.bf16.msra.mxu0 %v239
    %312 = vmatpush.bf16.msra.mxu0 %v235
    %313 = vmatpush.bf16.msra.mxu0 %v231
    %314 = vmatpush.bf16.msra.mxu0 %v227
    %315 = vmatpush.bf16.msra.mxu0 %v223
    %316 = vmatpush.bf16.msra.mxu0 %v219
    %317 = vmatpush.bf16.msra.mxu0 %v215
    %318 = vmatpush.bf16.msra.mxu0 %v211
    %319 = vmatmul.bf16.gmra.mxu0 %v111
    %v320 = vpop.f32.mrf.mxu0
    %v321 = vadd.f32 0.0, %v320
    %v322 = vpop.f32.mrf.mxu0
    %323 = vdwg.mxu0
    %v324 = vadd.f32 %v107, %v282
    %v325 = vadd.f32 %v108, %v295
    %v326 = vadd.f32 %v109, %v308
    %v327 = vadd.f32 %v110, %v321
    %v328 = vmul.f32 %v324, 0.5
    %v329 = vmul.f32 %v325, 0.5
    %v330 = vmul.f32 %v326, 0.5
    %v331 = vtanh.pop %v328
    %v332 = vtanh.pop %v329
    %v333 = vtanh.pop %v330
    %v334 = vmul.f32 %v331, 0.5
    %v335 = vmul.f32 %v332, 0.5
    %v336 = vmul.f32 %v333, 0.5
    %v337 = vadd.f32 %v334, 0.5
    %v338 = vadd.f32 %v335, 0.5
    %v339 = vadd.f32 %v336, 0.5
    %v340 = vtanh.pop %v327
    %v341 = vmul.f32 %v338, %v104
    %v342 = vmul.f32 %v337, %v340
    %v343 = vadd.f32 %v341, %v342
    %v344 = vtanh.pop %v343
    %v345 = vmul.f32 %v339, %v344
    %s346 = scalar_lea.vmem [#allocation4], 16
    %v347 = vld [vmem:[%s346] sm:$0xff]
    %v348 = vld [vmem:[%s346 + $0x8] sm:$0xff]
    %v349 = vunpack.c.l.bf16 %v347
    %v350 = vunpack.c.h.bf16 %v347
    %v351 = vunpack.c.l.bf16 %v348
    %v352 = vunpack.c.h.bf16 %v348
    %v353 = vpack.c.bf16 %v345, %v345
    %354 = vmatpush.bf16.msra.mxu0 %v236
    %355 = vmatpush.bf16.msra.mxu0 %v232
    %356 = vmatpush.bf16.msra.mxu0 %v228
    %357 = vmatpush.bf16.msra.mxu0 %v224
    %358 = vmatpush.bf16.msra.mxu0 %v220
    %359 = vmatpush.bf16.msra.mxu0 %v216
    %360 = vmatpush.bf16.msra.mxu0 %v212
    %361 = vmatpush.bf16.msra.mxu0 %v208
    %362 = vmatmul.bf16.gmra.mxu0 %v353
    %v363 = vpop.f32.mrf.mxu0
    %v364 = vadd.f32 0.0, %v363
    %v365 = vpop.f32.mrf.mxu0
    %366 = vdwg.mxu0
    %367 = vmatpush.bf16.msra.mxu0 %v237
    %368 = vmatpush.bf16.msra.mxu0 %v233
    %369 = vmatpush.bf16.msra.mxu0 %v229
    %370 = vmatpush.bf16.msra.mxu0 %v225
    %371 = vmatpush.bf16.msra.mxu0 %v221
    %372 = vmatpush.bf16.msra.mxu0 %v217
    %373 = vmatpush.bf16.msra.mxu0 %v213
    %374 = vmatpush.bf16.msra.mxu0 %v209
    %375 = vmatmul.bf16.gmra.mxu0 %v353
    %v376 = vpop.f32.mrf.mxu0
    %v377 = vadd.f32 0.0, %v376
    %v378 = vpop.f32.mrf.mxu0
    %379 = vdwg.mxu0
    %380 = vmatpush.bf16.msra.mxu0 %v238
    %381 = vmatpush.bf16.msra.mxu0 %v234
    %382 = vmatpush.bf16.msra.mxu0 %v230
    %383 = vmatpush.bf16.msra.mxu0 %v226
    %384 = vmatpush.bf16.msra.mxu0 %v222
    %385 = vmatpush.bf16.msra.mxu0 %v218
    %386 = vmatpush.bf16.msra.mxu0 %v214
    %387 = vmatpush.bf16.msra.mxu0 %v210
    %388 = vmatmul.bf16.gmra.mxu0 %v353
    %v389 = vpop.f32.mrf.mxu0
    %v390 = vadd.f32 0.0, %v389
    %v391 = vpop.f32.mrf.mxu0
    %392 = vdwg.mxu0
    %393 = vmatpush.bf16.msra.mxu0 %v239
    %394 = vmatpush.bf16.msra.mxu0 %v235
    %395 = vmatpush.bf16.msra.mxu0 %v231
    %396 = vmatpush.bf16.msra.mxu0 %v227
    %397 = vmatpush.bf16.msra.mxu0 %v223
    %398 = vmatpush.bf16.msra.mxu0 %v219
    %399 = vmatpush.bf16.msra.mxu0 %v215
    %400 = vmatpush.bf16.msra.mxu0 %v211
    %401 = vmatmul.bf16.gmra.mxu0 %v353
    %v402 = vpop.f32.mrf.mxu0
    %v403 = vadd.f32 0.0, %v402
    %v404 = vpop.f32.mrf.mxu0
    %405 = vdwg.mxu0
    %v406 = vadd.f32 %v349, %v364
    %v407 = vadd.f32 %v350, %v377
    %v408 = vadd.f32 %v351, %v390
    %v409 = vadd.f32 %v352, %v403
    %v410 = vmul.f32 %v406, 0.5
    %v411 = vmul.f32 %v407, 0.5
    %v412 = vmul.f32 %v408, 0.5
    %v413 = vtanh.pop %v410
    %v414 = vtanh.pop %v411
    %v415 = vtanh.pop %v412
    %v416 = vmul.f32 %v413, 0.5
    %v417 = vmul.f32 %v414, 0.5
    %v418 = vmul.f32 %v415, 0.5
    %v419 = vadd.f32 %v416, 0.5
    %v420 = vadd.f32 %v417, 0.5
    %v421 = vadd.f32 %v418, 0.5
    %v422 = vtanh.pop %v409
    %v423 = vmul.f32 %v420, %v343
    %v424 = vmul.f32 %v419, %v422
    %v425 = vadd.f32 %v423, %v424
    %v426 = vtanh.pop %v425
    %v427 = vmul.f32 %v421, %v426
    %s428 = scalar_lea.vmem [#allocation4], 32
    %v429 = vld [vmem:[%s428] sm:$0xff]
    %v430 = vld [vmem:[%s428 + $0x8] sm:$0xff]
    %v431 = vunpack.c.l.bf16 %v429
    %v432 = vunpack.c.h.bf16 %v429
    %v433 = vunpack.c.l.bf16 %v430
    %v434 = vunpack.c.h.bf16 %v430
    %v435 = vpack.c.bf16 %v427, %v427
    %436 = vmatpush.bf16.msra.mxu0 %v236
    %437 = vmatpush.bf16.msra.mxu0 %v232
    %438 = vmatpush.bf16.msra.mxu0 %v228
    %439 = vmatpush.bf16.msra.mxu0 %v224
    %440 = vmatpush.bf16.msra.mxu0 %v220
    %441 = vmatpush.bf16.msra.mxu0 %v216
    %442 = vmatpush.bf16.msra.mxu0 %v212
    %443 = vmatpush.bf16.msra.mxu0 %v208
    %444 = vmatmul.bf16.gmra.mxu0 %v435
    %v445 = vpop.f32.mrf.mxu0
    %v446 = vadd.f32 0.0, %v445
    %v447 = vpop.f32.mrf.mxu0
    %448 = vdwg.mxu0
    %449 = vmatpush.bf16.msra.mxu0 %v237
    %450 = vmatpush.bf16.msra.mxu0 %v233
    %451 = vmatpush.bf16.msra.mxu0 %v229
    %452 = vmatpush.bf16.msra.mxu0 %v225
    %453 = vmatpush.bf16.msra.mxu0 %v221
    %454 = vmatpush.bf16.msra.mxu0 %v217
    %455 = vmatpush.bf16.msra.mxu0 %v213
    %456 = vmatpush.bf16.msra.mxu0 %v209
    %457 = vmatmul.bf16.gmra.mxu0 %v435
    %v458 = vpop.f32.mrf.mxu0
    %v459 = vadd.f32 0.0, %v458
    %v460 = vpop.f32.mrf.mxu0
    %461 = vdwg.mxu0
    %462 = vmatpush.bf16.msra.mxu0 %v238
    %463 = vmatpush.bf16.msra.mxu0 %v234
    %464 = vmatpush.bf16.msra.mxu0 %v230
    %465 = vmatpush.bf16.msra.mxu0 %v226
    %466 = vmatpush.bf16.msra.mxu0 %v222
    %467 = vmatpush.bf16.msra.mxu0 %v218
    %468 = vmatpush.bf16.msra.mxu0 %v214
    %469 = vmatpush.bf16.msra.mxu0 %v210
    %470 = vmatmul.bf16.gmra.mxu0 %v435
    %v471 = vpop.f32.mrf.mxu0
    %v472 = vadd.f32 0.0, %v471
    %v473 = vpop.f32.mrf.mxu0
    %474 = vdwg.mxu0
    %475 = vmatpush.bf16.msra.mxu0 %v239
    %476 = vmatpush.bf16.msra.mxu0 %v235
    %477 = vmatpush.bf16.msra.mxu0 %v231
    %478 = vmatpush.bf16.msra.mxu0 %v227
    %479 = vmatpush.bf16.msra.mxu0 %v223
    %480 = vmatpush.bf16.msra.mxu0 %v219
    %481 = vmatpush.bf16.msra.mxu0 %v215
    %482 = vmatpush.bf16.msra.mxu0 %v211
    %483 = vmatmul.bf16.gmra.mxu0 %v435
    %v484 = vpop.f32.mrf.mxu0
    %v485 = vadd.f32 0.0, %v484
    %v486 = vpop.f32.mrf.mxu0
    %487 = vdwg.mxu0
    %v488 = vadd.f32 %v431, %v446
    %v489 = vadd.f32 %v432, %v459
    %v490 = vadd.f32 %v433, %v472
    %v491 = vadd.f32 %v434, %v485
    %v492 = vmul.f32 %v488, 0.5
    %v493 = vmul.f32 %v489, 0.5
    %v494 = vmul.f32 %v490, 0.5
    %v495 = vtanh.pop %v492
    %v496 = vtanh.pop %v493
    %v497 = vtanh.pop %v494
    %v498 = vmul.f32 %v495, 0.5
    %v499 = vmul.f32 %v496, 0.5
    %v500 = vmul.f32 %v497, 0.5
    %v501 = vadd.f32 %v498, 0.5
    %v502 = vadd.f32 %v499, 0.5
    %v503 = vadd.f32 %v500, 0.5
    %v504 = vtanh.pop %v491
    %v505 = vmul.f32 %v502, %v425
    %v506 = vmul.f32 %v501, %v504
    %v507 = vadd.f32 %v505, %v506
    %v508 = vtanh.pop %v507
    %v509 = vmul.f32 %v503, %v508
    %s510 = scalar_lea.vmem [#allocation4], 48
    %v511 = vld [vmem:[%s510] sm:$0xff]
    %v512 = vld [vmem:[%s510 + $0x8] sm:$0xff]
    %v513 = vunpack.c.l.bf16 %v511
    %v514 = vunpack.c.h.bf16 %v511
    %v515 = vunpack.c.l.bf16 %v512
    %v516 = vunpack.c.h.bf16 %v512
    %v517 = vpack.c.bf16 %v509, %v509
    %518 = vmatpush.bf16.msra.mxu0 %v236
    %519 = vmatpush.bf16.msra.mxu0 %v232
    %520 = vmatpush.bf16.msra.mxu0 %v228
    %521 = vmatpush.bf16.msra.mxu0 %v224
    %522 = vmatpush.bf16.msra.mxu0 %v220
    %523 = vmatpush.bf16.msra.mxu0 %v216
    %524 = vmatpush.bf16.msra.mxu0 %v212
    %525 = vmatpush.bf16.msra.mxu0 %v208
    %526 = vmatmul.bf16.gmra.mxu0 %v517
    %v527 = vpop.f32.mrf.mxu0
    %v528 = vadd.f32 0.0, %v527
    %v529 = vpop.f32.mrf.mxu0
    %530 = vdwg.mxu0
    %531 = vmatpush.bf16.msra.mxu0 %v237
    %532 = vmatpush.bf16.msra.mxu0 %v233
    %533 = vmatpush.bf16.msra.mxu0 %v229
    %534 = vmatpush.bf16.msra.mxu0 %v225
    %535 = vmatpush.bf16.msra.mxu0 %v221
    %536 = vmatpush.bf16.msra.mxu0 %v217
    %537 = vmatpush.bf16.msra.mxu0 %v213
    %538 = vmatpush.bf16.msra.mxu0 %v209
    %539 = vmatmul.bf16.gmra.mxu0 %v517
    %v540 = vpop.f32.mrf.mxu0
    %v541 = vadd.f32 0.0, %v540
    %v542 = vpop.f32.mrf.mxu0
    %543 = vdwg.mxu0
    %544 = vmatpush.bf16.msra.mxu0 %v238
    %545 = vmatpush.bf16.msra.mxu0 %v234
    %546 = vmatpush.bf16.msra.mxu0 %v230
    %547 = vmatpush.bf16.msra.mxu0 %v226
    %548 = vmatpush.bf16.msra.mxu0 %v222
    %549 = vmatpush.bf16.msra.mxu0 %v218
    %550 = vmatpush.bf16.msra.mxu0 %v214
    %551 = vmatpush.bf16.msra.mxu0 %v210
    %552 = vmatmul.bf16.gmra.mxu0 %v517
    %v553 = vpop.f32.mrf.mxu0
    %v554 = vadd.f32 0.0, %v553
    %v555 = vpop.f32.mrf.mxu0
    %556 = vdwg.mxu0
    %557 = vmatpush.bf16.msra.mxu0 %v239
    %558 = vmatpush.bf16.msra.mxu0 %v235
    %559 = vmatpush.bf16.msra.mxu0 %v231
    %560 = vmatpush.bf16.msra.mxu0 %v227
    %561 = vmatpush.bf16.msra.mxu0 %v223
    %562 = vmatpush.bf16.msra.mxu0 %v219
    %563 = vmatpush.bf16.msra.mxu0 %v215
    %564 = vmatpush.bf16.msra.mxu0 %v211
    %565 = vmatmul.bf16.gmra.mxu0 %v517
    %v566 = vpop.f32.mrf.mxu0
    %v567 = vadd.f32 0.0, %v566
    %v568 = vpop.f32.mrf.mxu0
    %569 = vdwg.mxu0
    %v570 = vadd.f32 %v513, %v528
    %v571 = vadd.f32 %v514, %v541
    %v572 = vadd.f32 %v515, %v554
    %v573 = vadd.f32 %v516, %v567
    %v574 = vmul.f32 %v570, 0.5
    %v575 = vmul.f32 %v571, 0.5
    %v576 = vmul.f32 %v572, 0.5
    %v577 = vtanh.pop %v574
    %v578 = vtanh.pop %v575
    %v579 = vtanh.pop %v576
    %v580 = vmul.f32 %v577, 0.5
    %v581 = vmul.f32 %v578, 0.5
    %v582 = vmul.f32 %v579, 0.5
    %v583 = vadd.f32 %v580, 0.5
    %v584 = vadd.f32 %v581, 0.5
    %v585 = vadd.f32 %v582, 0.5
    %v586 = vtanh.pop %v573
    %v587 = vmul.f32 %v584, %v507
    %v588 = vmul.f32 %v583, %v586
    %v589 = vadd.f32 %v587, %v588
    %v590 = vtanh.pop %v589
    %v591 = vmul.f32 %v585, %v590
    %s592 = scalar_lea.vmem [#allocation4], 64
    %v593 = vld [vmem:[%s592] sm:$0xff]
    %v594 = vld [vmem:[%s592 + $0x8] sm:$0xff]
    %v595 = vunpack.c.l.bf16 %v593
    %v596 = vunpack.c.h.bf16 %v593
    %v597 = vunpack.c.l.bf16 %v594
    %v598 = vunpack.c.h.bf16 %v594
    %v599 = vpack.c.bf16 %v591, %v591
    %600 = vmatpush.bf16.msra.mxu0 %v236
    %601 = vmatpush.bf16.msra.mxu0 %v232
    %602 = vmatpush.bf16.msra.mxu0 %v228
    %603 = vmatpush.bf16.msra.mxu0 %v224
    %604 = vmatpush.bf16.msra.mxu0 %v220
    %605 = vmatpush.bf16.msra.mxu0 %v216
    %606 = vmatpush.bf16.msra.mxu0 %v212
    %607 = vmatpush.bf16.msra.mxu0 %v208
    %608 = vmatmul.bf16.gmra.mxu0 %v599
    %v609 = vpop.f32.mrf.mxu0
    %v610 = vadd.f32 0.0, %v609
    %v611 = vpop.f32.mrf.mxu0
    %612 = vdwg.mxu0
    %613 = vmatpush.bf16.msra.mxu0 %v237
    %614 = vmatpush.bf16.msra.mxu0 %v233
    %615 = vmatpush.bf16.msra.mxu0 %v229
    %616 = vmatpush.bf16.msra.mxu0 %v225
    %617 = vmatpush.bf16.msra.mxu0 %v221
    %618 = vmatpush.bf16.msra.mxu0 %v217
    %619 = vmatpush.bf16.msra.mxu0 %v213
    %620 = vmatpush.bf16.msra.mxu0 %v209
    %621 = vmatmul.bf16.gmra.mxu0 %v599
    %v622 = vpop.f32.mrf.mxu0
    %v623 = vadd.f32 0.0, %v622
    %v624 = vpop.f32.mrf.mxu0
    %625 = vdwg.mxu0
    %626 = vmatpush.bf16.msra.mxu0 %v238
    %627 = vmatpush.bf16.msra.mxu0 %v234
    %628 = vmatpush.bf16.msra.mxu0 %v230
    %629 = vmatpush.bf16.msra.mxu0 %v226
    %630 = vmatpush.bf16.msra.mxu0 %v222
    %631 = vmatpush.bf16.msra.mxu0 %v218
    %632 = vmatpush.bf16.msra.mxu0 %v214
    %633 = vmatpush.bf16.msra.mxu0 %v210
    %634 = vmatmul.bf16.gmra.mxu0 %v599
    %v635 = vpop.f32.mrf.mxu0
    %v636 = vadd.f32 0.0, %v635
    %v637 = vpop.f32.mrf.mxu0
    %638 = vdwg.mxu0
    %639 = vmatpush.bf16.msra.mxu0 %v239
    %640 = vmatpush.bf16.msra.mxu0 %v235
    %641 = vmatpush.bf16.msra.mxu0 %v231
    %642 = vmatpush.bf16.msra.mxu0 %v227
    %643 = vmatpush.bf16.msra.mxu0 %v223
    %644 = vmatpush.bf16.msra.mxu0 %v219
    %645 = vmatpush.bf16.msra.mxu0 %v215
    %646 = vmatpush.bf16.msra.mxu0 %v211
    %647 = vmatmul.bf16.gmra.mxu0 %v599
    %v648 = vpop.f32.mrf.mxu0
    %v649 = vadd.f32 0.0, %v648
    %v650 = vpop.f32.mrf.mxu0
    %651 = vdwg.mxu0
    %v652 = vadd.f32 %v595, %v610
    %v653 = vadd.f32 %v596, %v623
    %v654 = vadd.f32 %v597, %v636
    %v655 = vadd.f32 %v598, %v649
    %v656 = vmul.f32 %v652, 0.5
    %v657 = vmul.f32 %v653, 0.5
    %v658 = vmul.f32 %v654, 0.5
    %v659 = vtanh.pop %v656
    %v660 = vtanh.pop %v657
    %v661 = vtanh.pop %v658
    %v662 = vmul.f32 %v659, 0.5
    %v663 = vmul.f32 %v660, 0.5
    %v664 = vmul.f32 %v661, 0.5
    %v665 = vadd.f32 %v662, 0.5
    %v666 = vadd.f32 %v663, 0.5
    %v667 = vadd.f32 %v664, 0.5
    %v668 = vtanh.pop %v655
    %v669 = vmul.f32 %v666, %v589
    %v670 = vmul.f32 %v665, %v668
    %v671 = vadd.f32 %v669, %v670
    %v672 = vtanh.pop %v671
    %v673 = vmul.f32 %v667, %v672
    %s674 = scalar_lea.vmem [#allocation4], 80
    %v675 = vld [vmem:[%s674] sm:$0xff]
    %v676 = vld [vmem:[%s674 + $0x8] sm:$0xff]
    %v677 = vunpack.c.l.bf16 %v675
    %v678 = vunpack.c.h.bf16 %v675
    %v679 = vunpack.c.l.bf16 %v676
    %v680 = vunpack.c.h.bf16 %v676
    %v681 = vpack.c.bf16 %v673, %v673
    %682 = vmatpush.bf16.msra.mxu0 %v236
    %683 = vmatpush.bf16.msra.mxu0 %v232
    %684 = vmatpush.bf16.msra.mxu0 %v228
    %685 = vmatpush.bf16.msra.mxu0 %v224
    %686 = vmatpush.bf16.msra.mxu0 %v220
    %687 = vmatpush.bf16.msra.mxu0 %v216
    %688 = vmatpush.bf16.msra.mxu0 %v212
    %689 = vmatpush.bf16.msra.mxu0 %v208
    %690 = vmatmul.bf16.gmra.mxu0 %v681
    %v691 = vpop.f32.mrf.mxu0
    %v692 = vadd.f32 0.0, %v691
    %v693 = vpop.f32.mrf.mxu0
    %694 = vdwg.mxu0
    %695 = vmatpush.bf16.msra.mxu0 %v237
    %696 = vmatpush.bf16.msra.mxu0 %v233
    %697 = vmatpush.bf16.msra.mxu0 %v229
    %698 = vmatpush.bf16.msra.mxu0 %v225
    %699 = vmatpush.bf16.msra.mxu0 %v221
    %700 = vmatpush.bf16.msra.mxu0 %v217
    %701 = vmatpush.bf16.msra.mxu0 %v213
    %702 = vmatpush.bf16.msra.mxu0 %v209
    %703 = vmatmul.bf16.gmra.mxu0 %v681
    %v704 = vpop.f32.mrf.mxu0
    %v705 = vadd.f32 0.0, %v704
    %v706 = vpop.f32.mrf.mxu0
    %707 = vdwg.mxu0
    %708 = vmatpush.bf16.msra.mxu0 %v238
    %709 = vmatpush.bf16.msra.mxu0 %v234
    %710 = vmatpush.bf16.msra.mxu0 %v230
    %711 = vmatpush.bf16.msra.mxu0 %v226
    %712 = vmatpush.bf16.msra.mxu0 %v222
    %713 = vmatpush.bf16.msra.mxu0 %v218
    %714 = vmatpush.bf16.msra.mxu0 %v214
    %715 = vmatpush.bf16.msra.mxu0 %v210
    %716 = vmatmul.bf16.gmra.mxu0 %v681
    %v717 = vpop.f32.mrf.mxu0
    %v718 = vadd.f32 0.0, %v717
    %v719 = vpop.f32.mrf.mxu0
    %720 = vdwg.mxu0
    %721 = vmatpush.bf16.msra.mxu0 %v239
    %722 = vmatpush.bf16.msra.mxu0 %v235
    %723 = vmatpush.bf16.msra.mxu0 %v231
    %724 = vmatpush.bf16.msra.mxu0 %v227
    %725 = vmatpush.bf16.msra.mxu0 %v223
    %726 = vmatpush.bf16.msra.mxu0 %v219
    %727 = vmatpush.bf16.msra.mxu0 %v215
    %728 = vmatpush.bf16.msra.mxu0 %v211
    %729 = vmatmul.bf16.gmra.mxu0 %v681
    %v730 = vpop.f32.mrf.mxu0
    %v731 = vadd.f32 0.0, %v730
    %v732 = vpop.f32.mrf.mxu0
    %733 = vdwg.mxu0
    %v734 = vadd.f32 %v677, %v692
    %v735 = vadd.f32 %v678, %v705
    %v736 = vadd.f32 %v679, %v718
    %v737 = vadd.f32 %v680, %v731
    %v738 = vmul.f32 %v734, 0.5
    %v739 = vmul.f32 %v735, 0.5
    %v740 = vmul.f32 %v736, 0.5
    %v741 = vtanh.pop %v738
    %v742 = vtanh.pop %v739
    %v743 = vtanh.pop %v740
    %v744 = vmul.f32 %v741, 0.5
    %v745 = vmul.f32 %v742, 0.5
    %v746 = vmul.f32 %v743, 0.5
    %v747 = vadd.f32 %v744, 0.5
    %v748 = vadd.f32 %v745, 0.5
    %v749 = vadd.f32 %v746, 0.5
    %v750 = vtanh.pop %v737
    %v751 = vmul.f32 %v748, %v671
    %v752 = vmul.f32 %v747, %v750
    %v753 = vadd.f32 %v751, %v752
    %v754 = vtanh.pop %v753
    %v755 = vmul.f32 %v749, %v754
    %s756 = scalar_lea.vmem [#allocation4], 96
    %v757 = vld [vmem:[%s756] sm:$0xff]
    %v758 = vld [vmem:[%s756 + $0x8] sm:$0xff]
    %v759 = vunpack.c.l.bf16 %v757
    %v760 = vunpack.c.h.bf16 %v757
    %v761 = vunpack.c.l.bf16 %v758
    %v762 = vunpack.c.h.bf16 %v758
    %v763 = vpack.c.bf16 %v755, %v755
    %764 = vmatpush.bf16.msra.mxu0 %v236
    %765 = vmatpush.bf16.msra.mxu0 %v232
    %766 = vmatpush.bf16.msra.mxu0 %v228
    %767 = vmatpush.bf16.msra.mxu0 %v224
    %768 = vmatpush.bf16.msra.mxu0 %v220
    %769 = vmatpush.bf16.msra.mxu0 %v216
    %770 = vmatpush.bf16.msra.mxu0 %v212
    %771 = vmatpush.bf16.msra.mxu0 %v208
    %772 = vmatmul.bf16.gmra.mxu0 %v763
    %v773 = vpop.f32.mrf.mxu0
    %v774 = vadd.f32 0.0, %v773
    %v775 = vpop.f32.mrf.mxu0
    %776 = vdwg.mxu0
    %777 = vmatpush.bf16.msra.mxu0 %v237
    %778 = vmatpush.bf16.msra.mxu0 %v233
    %779 = vmatpush.bf16.msra.mxu0 %v229
    %780 = vmatpush.bf16.msra.mxu0 %v225
    %781 = vmatpush.bf16.msra.mxu0 %v221
    %782 = vmatpush.bf16.msra.mxu0 %v217
    %783 = vmatpush.bf16.msra.mxu0 %v213
    %784 = vmatpush.bf16.msra.mxu0 %v209
    %785 = vmatmul.bf16.gmra.mxu0 %v763
    %v786 = vpop.f32.mrf.mxu0
    %v787 = vadd.f32 0.0, %v786
    %v788 = vpop.f32.mrf.mxu0
    %789 = vdwg.mxu0
    %790 = vmatpush.bf16.msra.mxu0 %v238
    %791 = vmatpush.bf16.msra.mxu0 %v234
    %792 = vmatpush.bf16.msra.mxu0 %v230
    %793 = vmatpush.bf16.msra.mxu0 %v226
    %794 = vmatpush.bf16.msra.mxu0 %v222
    %795 = vmatpush.bf16.msra.mxu0 %v218
    %796 = vmatpush.bf16.msra.mxu0 %v214
    %797 = vmatpush.bf16.msra.mxu0 %v210
    %798 = vmatmul.bf16.gmra.mxu0 %v763
    %v799 = vpop.f32.mrf.mxu0
    %v800 = vadd.f32 0.0, %v799
    %v801 = vpop.f32.mrf.mxu0
    %802 = vdwg.mxu0
    %803 = vmatpush.bf16.msra.mxu0 %v239
    %804 = vmatpush.bf16.msra.mxu0 %v235
    %805 = vmatpush.bf16.msra.mxu0 %v231
    %806 = vmatpush.bf16.msra.mxu0 %v227
    %807 = vmatpush.bf16.msra.mxu0 %v223
    %808 = vmatpush.bf16.msra.mxu0 %v219
    %809 = vmatpush.bf16.msra.mxu0 %v215
    %810 = vmatpush.bf16.msra.mxu0 %v211
    %811 = vmatmul.bf16.gmra.mxu0 %v763
    %v812 = vpop.f32.mrf.mxu0
    %v813 = vadd.f32 0.0, %v812
    %v814 = vpop.f32.mrf.mxu0
    %815 = vdwg.mxu0
    %v816 = vadd.f32 %v759, %v774
    %v817 = vadd.f32 %v760, %v787
    %v818 = vadd.f32 %v761, %v800
    %v819 = vadd.f32 %v762, %v813
    %v820 = vmul.f32 %v816, 0.5
    %v821 = vmul.f32 %v817, 0.5
    %v822 = vmul.f32 %v818, 0.5
    %v823 = vtanh.pop %v820
    %v824 = vtanh.pop %v821
    %v825 = vtanh.pop %v822
    %v826 = vmul.f32 %v823, 0.5
    %v827 = vmul.f32 %v824, 0.5
    %v828 = vmul.f32 %v825, 0.5
    %v829 = vadd.f32 %v826, 0.5
    %v830 = vadd.f32 %v827, 0.5
    %v831 = vadd.f32 %v828, 0.5
    %v832 = vtanh.pop %v819
    %v833 = vmul.f32 %v830, %v753
    %v834 = vmul.f32 %v829, %v832
    %v835 = vadd.f32 %v833, %v834
    %v836 = vtanh.pop %v835
    %v837 = vmul.f32 %v831, %v836
    %s838 = scalar_lea.vmem [#allocation4], 112
    %v839 = vld [vmem:[%s838] sm:$0xff]
    %v840 = vld [vmem:[%s838 + $0x8] sm:$0xff]
    %v841 = vunpack.c.l.bf16 %v839
    %v842 = vunpack.c.h.bf16 %v839
    %v843 = vunpack.c.l.bf16 %v840
    %v844 = vunpack.c.h.bf16 %v840
    %v845 = vpack.c.bf16 %v837, %v837
    %846 = vmatpush.bf16.msra.mxu0 %v236
    %847 = vmatpush.bf16.msra.mxu0 %v232
    %848 = vmatpush.bf16.msra.mxu0 %v228
    %849 = vmatpush.bf16.msra.mxu0 %v224
    %850 = vmatpush.bf16.msra.mxu0 %v220
    %851 = vmatpush.bf16.msra.mxu0 %v216
    %852 = vmatpush.bf16.msra.mxu0 %v212
    %853 = vmatpush.bf16.msra.mxu0 %v208
    %854 = vmatmul.bf16.gmra.mxu0 %v845
    %v855 = vpop.f32.mrf.mxu0
    %v856 = vadd.f32 0.0, %v855
    %v857 = vpop.f32.mrf.mxu0
    %858 = vdwg.mxu0
    %859 = vmatpush.bf16.msra.mxu0 %v237
    %860 = vmatpush.bf16.msra.mxu0 %v233
    %861 = vmatpush.bf16.msra.mxu0 %v229
    %862 = vmatpush.bf16.msra.mxu0 %v225
    %863 = vmatpush.bf16.msra.mxu0 %v221
    %864 = vmatpush.bf16.msra.mxu0 %v217
    %865 = vmatpush.bf16.msra.mxu0 %v213
    %866 = vmatpush.bf16.msra.mxu0 %v209
    %867 = vmatmul.bf16.gmra.mxu0 %v845
    %v868 = vpop.f32.mrf.mxu0
    %v869 = vadd.f32 0.0, %v868
    %v870 = vpop.f32.mrf.mxu0
    %871 = vdwg.mxu0
    %872 = vmatpush.bf16.msra.mxu0 %v238
    %873 = vmatpush.bf16.msra.mxu0 %v234
    %874 = vmatpush.bf16.msra.mxu0 %v230
    %875 = vmatpush.bf16.msra.mxu0 %v226
    %876 = vmatpush.bf16.msra.mxu0 %v222
    %877 = vmatpush.bf16.msra.mxu0 %v218
    %878 = vmatpush.bf16.msra.mxu0 %v214
    %879 = vmatpush.bf16.msra.mxu0 %v210
    %880 = vmatmul.bf16.gmra.mxu0 %v845
    %v881 = vpop.f32.mrf.mxu0
    %v882 = vadd.f32 0.0, %v881
    %v883 = vpop.f32.mrf.mxu0
    %884 = vdwg.mxu0
    %885 = vmatpush.bf16.msra.mxu0 %v239
    %886 = vmatpush.bf16.msra.mxu0 %v235
    %887 = vmatpush.bf16.msra.mxu0 %v231
    %888 = vmatpush.bf16.msra.mxu0 %v227
    %889 = vmatpush.bf16.msra.mxu0 %v223
    %890 = vmatpush.bf16.msra.mxu0 %v219
    %891 = vmatpush.bf16.msra.mxu0 %v215
    %892 = vmatpush.bf16.msra.mxu0 %v211
    %893 = vmatmul.bf16.gmra.mxu0 %v845
    %v894 = vpop.f32.mrf.mxu0
    %v895 = vadd.f32 0.0, %v894
    %v896 = vpop.f32.mrf.mxu0
    %897 = vdwg.mxu0
    %v898 = vadd.f32 %v841, %v856
    %v899 = vadd.f32 %v842, %v869
    %v900 = vadd.f32 %v843, %v882
    %v901 = vadd.f32 %v844, %v895
    %v902 = vmul.f32 %v898, 0.5
    %v903 = vmul.f32 %v899, 0.5
    %v904 = vmul.f32 %v900, 0.5
    %v905 = vtanh.pop %v902
    %v906 = vtanh.pop %v903
    %v907 = vtanh.pop %v904
    %v908 = vmul.f32 %v905, 0.5
    %v909 = vmul.f32 %v906, 0.5
    %v910 = vmul.f32 %v907, 0.5
    %v911 = vadd.f32 %v908, 0.5
    %v912 = vadd.f32 %v909, 0.5
    %v913 = vadd.f32 %v910, 0.5
    %v914 = vtanh.pop %v901
    %v915 = vmul.f32 %v912, %v835
    %v916 = vmul.f32 %v911, %v914
    %v917 = vadd.f32 %v915, %v916
    %v918 = vtanh.pop %v917
    %v919 = vmul.f32 %v913, %v918
    %920 = vst [vmem:[#allocation2] sm:$0xff] %v919
    %921 = vst [vmem:[#allocation3] sm:$0xff] %v917
    // Predicated region
    $region34: #{tpu_custom_call.1} parent=1 // pred_check
      %p922 = pneg %p65
    $region35: #{tpu_custom_call.1} parent=1 // pred_check_branch
      %924 = sbr.rel (%p922) target = $region37
    $region36: #{tpu_custom_call.1} parent=1 // pred_region
      %v925 = vpack.c.bf16 %v919, %v919
      %v926 = vld [vmem:[#allocation9] sm:$0xf]
      %v927 = vld [vmem:[#allocation9 + $0x4] sm:$0xf]
      %v928 = vld [vmem:[#allocation9 + $0x8] sm:$0xf]
      %v929 = vld [vmem:[#allocation9 + $0xc] sm:$0xf]
      %v930 = vld [vmem:[#allocation9 + $0x10] sm:$0xf]
      %v931 = vld [vmem:[#allocation9 + $0x14] sm:$0xf]
      %v932 = vld [vmem:[#allocation9 + $0x18] sm:$0xf]
      %v933 = vld [vmem:[#allocation9 + $0x1c] sm:$0xf]
      %v934 = vld [vmem:[#allocation9 + $0x20] sm:$0xf]
      %v935 = vld [vmem:[#allocation9 + $0x24] sm:$0xf]
      %v936 = vld [vmem:[#allocation9 + $0x28] sm:$0xf]
      %v937 = vld [vmem:[#allocation9 + $0x2c] sm:$0xf]
      %v938 = vld [vmem:[#allocation9 + $0x30] sm:$0xf]
      %v939 = vld [vmem:[#allocation9 + $0x34] sm:$0xf]
      %v940 = vld [vmem:[#allocation9 + $0x38] sm:$0xf]
      %v941 = vld [vmem:[#allocation9 + $0x3c] sm:$0xf]
      %v942 = vld [vmem:[%s3] sm:$0x1]
      %v944 = vperm.slane %v942, 0
      %v962 = vunpack.c.l.b16 %v926
      %v963 = vunpack.c.l.b16 %v927
      %v964 = vunpack.c.l.b16 %v928
      %v965 = vunpack.c.l.b16 %v929
      %v966 = vunpack.c.l.b16 %v930
      %v967 = vunpack.c.l.b16 %v931
      %v968 = vunpack.c.l.b16 %v932
      %v969 = vunpack.c.l.b16 %v933
      %v970 = vunpack.c.l.b16 %v934
      %v971 = vunpack.c.l.b16 %v935
      %v972 = vunpack.c.l.b16 %v936
      %v973 = vunpack.c.l.b16 %v937
      %v974 = vunpack.c.l.b16 %v938
      %v975 = vunpack.c.l.b16 %v939
      %v976 = vunpack.c.l.b16 %v940
      %v977 = vunpack.c.l.b16 %v941
      %v978 = vpack.c.b16 %v963, %v962
      %v979 = vpack.c.b16 %v965, %v964
      %v980 = vpack.c.b16 %v967, %v966
      %v981 = vpack.c.b16 %v969, %v968
      %v982 = vpack.c.b16 %v971, %v970
      %v983 = vpack.c.b16 %v973, %v972
      %v984 = vpack.c.b16 %v975, %v974
      %v985 = vpack.c.b16 %v977, %v976
      %994 = vmatpush.bf16.msra.mxu0 %v985
      %995 = vmatpush.bf16.msra.mxu0 %v984
      %996 = vmatpush.bf16.msra.mxu0 %v983
      %997 = vmatpush.bf16.msra.mxu0 %v982
      %998 = vmatpush.bf16.msra.mxu0 %v981
      %999 = vmatpush.bf16.msra.mxu0 %v980
      %1000 = vmatpush.bf16.msra.mxu0 %v979
      %1001 = vmatpush.bf16.msra.mxu0 %v978
      %1002 = vmatmul.bf16.gmra.mxu0 %v925
      %v1003 = vpop.f32.mrf.mxu0
      %v1004 = vadd.f32 %v944, %v1003
      %v1005 = vpop.f32.mrf.mxu0
      %1006 = vdwg.mxu0
      %1007 = vst [vmem:[#allocation10] sm:$0xff] %v1004
    $region37: #{tpu_custom_call.1} parent=1 // pred_fallthru
      _
    // Predicated region
    $region38: #{tpu_custom_call.1} parent=1 // pred_check
      _
    $region39: #{tpu_custom_call.1} parent=1 // pred_check_branch
      %1009 = sbr.rel (0) target = $region41
    $region40: #{tpu_custom_call.1} parent=1 // pred_region
      %1011 = vsyncadd [#allocation6], 0
      %s1013 = sshll.u32 [#allocation10], 4
      %s1014 = int_to_ptr.vmem [resolvable:$true] %s1013
      %s1015 = sshll.u32 %s4, 4
      %s1016 = int_to_ptr.hbm [resolvable:$true] %s1015
      %1018 = dma.vmem_to_hbm [thread:$0]  %s1014, 128, %s1016, [#allocation6]
    $region41: #{tpu_custom_call.1} parent=1 // pred_fallthru
      _
    // Predicated region
    $region42: #{tpu_custom_call.1} parent=1 // pred_check
      _
    $region43: #{tpu_custom_call.1} parent=1 // pred_check_branch
      %1020 = sbr.rel (0) target = $region45
    $region44: #{tpu_custom_call.1} parent=1 // pred_region
      %1022 = dma.done [#allocation6], 128
    $region45: #{tpu_custom_call.1} parent=1 // pred_fallthru
      _
    %1023 = vsyncpa [#allocation5], 1
    %1024 = vsyncpa [#allocation8], 1
    %1025 = vsyncpa [#allocation6], 1

</llo_original>
